<compile_context>
chip_gen: v5e
topology: v5e:2x2
jax: 0.10.0
libtpu: 0.0.40
codegen_flags: <defaults>
</compile_context>

<pallas_src>
import math
import functools

import jax
import jax.numpy as jnp
from jax import lax
from jax.experimental import pallas as pl
from jax.experimental.pallas import tpu as pltpu


# 48 MiB: <= v7x physical VMEM (64 MiB/TC) with headroom for compiler scratch,
# and a useful raise over the 16/32 MiB scoped default on v5e/v6e (128 MiB).
_VMEM_LIMIT_BYTES = 48 * 1024 * 1024


def _pick_tile(s, preferred=None):
    """Largest 'nice' tile dividing s; assert instead of silently blowing VMEM."""
    for t in (preferred, 512, 256, 128, 64, 32, 16, 8):
        if t is not None and t <= s and s % t == 0:
            return t
    assert s <= 1024, (
        f"no MXU-friendly tile divides S={s}; pad the spatial extent or pass "
        "explicit token/q/kv tiles")
    return s


# ---------------------------------------------------------------------------
# Kernel 1: fused concat + QKV projection.
#   One wide (ts, Cin) @ (Cin, 3C) matmul per input (main / aux), f32 accum,
#   bias added in f32, then per-head lane slices written as bf16 into
#   head-major (B, H, S, d) q / k / v.  1/sqrt(d) is folded into Wq / bq.
# ---------------------------------------------------------------------------
def _qkv_proj_kernel(num_heads, cdim,
                     xm_ref, xa_ref, wm_ref, wa_ref, b_ref,
                     q_ref, k_ref, v_ref):
    y = (jnp.dot(xm_ref[0], wm_ref[...], preferred_element_type=jnp.float32)
         + jnp.dot(xa_ref[0], wa_ref[...], preferred_element_type=jnp.float32)
         + b_ref[...])                                   # (ts, 3C) f32

    d = q_ref.shape[3]
    for h in range(num_heads):
        q_ref[0, h] = y[:, h * d:(h + 1) * d].astype(q_ref.dtype)
        k_ref[0, h] = y[:, cdim + h * d:cdim + (h + 1) * d].astype(k_ref.dtype)
        v_ref[0, h] = y[:, 2 * cdim + h * d:2 * cdim + (h + 1) * d].astype(v_ref.dtype)


# ---------------------------------------------------------------------------
# Kernel 2: flash-style attention + fused (Wo @ conv1x1) output projection,
# writing the channel-major (B, Cm, S) output directly (lane dim = tq >= 128).
# grid = (B, q_tiles, kv_tiles); kv axis is the "arbitrary" reduction axis.
# ---------------------------------------------------------------------------
def _flash_attn_kernel(num_heads,
                       q_ref, k_ref, v_ref, wf_ref, bf_ref,
                       out_ref,
                       m_s, l_s, acc_s):
    ki = pl.program_id(2)

    @pl.when(ki == 0)
    def _init():
        m_s[...] = jnp.full(m_s.shape, -jnp.inf, dtype=m_s.dtype)
        l_s[...] = jnp.zeros(l_s.shape, dtype=l_s.dtype)
        acc_s[...] = jnp.zeros(acc_s.shape, dtype=acc_s.dtype)

    for h in range(num_heads):
        qh = q_ref[0, h]                                 # (tq, d) bf16, pre-scaled
        kh = k_ref[0, h]                                 # (tk, d) bf16
        vh = v_ref[0, h]                                 # (tk, d) bf16

        # scores: contraction over d, rhs-transposed (q @ k^T), f32 accum
        s = lax.dot_general(qh, kh, (((1,), (1,)), ((), ())),
                            preferred_element_type=jnp.float32)      # (tq, tk)

        m_prev = m_s[h]                                              # (tq, 1)
        m_new = jnp.maximum(m_prev, jnp.max(s, axis=-1, keepdims=True))
        alpha = jnp.exp(m_prev - m_new)
        p = jnp.exp(s - m_new)                                       # (tq, tk) f32

        l_s[h] = alpha * l_s[h] + jnp.sum(p, axis=-1, keepdims=True)
        acc_s[h] = alpha * acc_s[h] + jnp.dot(p.astype(vh.dtype), vh,
                                              preferred_element_type=jnp.float32)
        m_s[h] = m_new

    @pl.when(ki == pl.num_programs(2) - 1)
    def _finalize():
        cm = out_ref.shape[1]
        tq = out_ref.shape[2]
        # Start from the fused bias, then accumulate per-head output-projection
        # contributions directly into the output VMEM block (no big register
        # accumulator across the unrolled head loop).
        out_ref[0] = jnp.broadcast_to(bf_ref[...], (cm, tq))
        for h in range(num_heads):
            # normalize after PV; reciprocal on the EUP (approx) instead of VALU div
            o_h = (acc_s[h] * pl.reciprocal(l_s[h], approx=True)
                   ).astype(jnp.bfloat16)                            # (tq, d)
            out_ref[0] += lax.dot_general(wf_ref[h], o_h,
                                          (((1,), (1,)), ((), ())),
                                          preferred_element_type=jnp.float32)


# ---------------------------------------------------------------------------
# Wrapper
# ---------------------------------------------------------------------------
def feature_fusion_forward(feature_main, feature_aux, params, num_heads,
                           *, token_tile=None, q_tile=None, kv_tile=None):
    """feature_main: (B, Cm, H, W), feature_aux: (B, Ca, H, W) -> (B, Cm, H, W)."""
    B, Cm, H, W = feature_main.shape
    Ca = feature_aux.shape[1]
    C = Cm + Ca
    S = H * W
    assert C % num_heads == 0, "combined channels must be divisible by num_heads"
    d = C // num_heads
    f32, bf16 = jnp.float32, jnp.bfloat16

    # ---- weight preparation (trace-time, fusion done in f32, cast last) ----
    scale = 1.0 / math.sqrt(d)
    wq_t = params["wq"].astype(f32).T * scale        # (C, C) (in, out), scale folded
    wk_t = params["wk"].astype(f32).T
    wv_t = params["wv"].astype(f32).T
    w_all = jnp.concatenate([wq_t, wk_t, wv_t], axis=1)              # (C, 3C)
    wm = w_all[:Cm].astype(bf16)                                     # (Cm, 3C)
    wa = w_all[Cm:].astype(bf16)                                     # (Ca, 3C)
    b_all = jnp.concatenate([params["bq"].astype(f32) * scale,
                             params["bk"].astype(f32),
                             params["bv"].astype(f32)]).reshape(1, 3 * C)  # f32

    # Fuse fc_out (Wo, bo) with the 1x1 conv (Wc, bc):
    #   y = ((attn @ Wo^T + bo) @ Wc^T + bc) = attn @ (Wc @ Wo)^T + (Wc @ bo + bc)
    wo = params["wo"].astype(f32)                                    # (C, C)
    wc = params["wc"].astype(f32).reshape(Cm, C)                     # (Cm, C)
    w_fused = wc @ wo                                                # (Cm, C), f32 fusion
    w_fused_h = w_fused.reshape(Cm, num_heads, d).transpose(1, 0, 2).astype(bf16)
    b_fused = (wc @ params["bo"].astype(f32)
               + params["bc"].astype(f32)).reshape(Cm, 1)            # (Cm, 1) f32

    # ---- activations: NCHW -> token-major (bf16); no channel concat ----------
    # TODO(synk): consume channel-major (B, Cm, S) in-kernel to drop this pass.
    xm = feature_main.reshape(B, Cm, S).transpose(0, 2, 1).astype(bf16)   # (B,S,Cm)
    xa = feature_aux.reshape(B, Ca, S).transpose(0, 2, 1).astype(bf16)    # (B,S,Ca)

    ts = _pick_tile(S, token_tile)
    tq = _pick_tile(S, q_tile)
    tk = _pick_tile(S, kv_tile)
    nts, nq, nk = S // ts, S // tq, S // tk

    # ---- kernel 1: wide QKV projection --------------------------------------
    qkv_shape = jax.ShapeDtypeStruct((B, num_heads, S, d), bf16)
    q, k, v = pl.pallas_call(
        functools.partial(_qkv_proj_kernel, num_heads, C),
        out_shape=(qkv_shape, qkv_shape, qkv_shape),
        grid_spec=pltpu.PrefetchScalarGridSpec(
            num_scalar_prefetch=0,
            grid=(B, nts),
            in_specs=[
                pl.BlockSpec((1, ts, Cm), lambda b, t: (b, t, 0)),
                pl.BlockSpec((1, ts, Ca), lambda b, t: (b, t, 0)),
                # constant-index weights: single-buffer to save VMEM
                pl.BlockSpec((Cm, 3 * C), lambda b, t: (0, 0),
                             pipeline_mode=pl.Buffered(1)),
                pl.BlockSpec((Ca, 3 * C), lambda b, t: (0, 0),
                             pipeline_mode=pl.Buffered(1)),
                pl.BlockSpec((1, 3 * C), lambda b, t: (0, 0),
                             pipeline_mode=pl.Buffered(1)),
            ],
            out_specs=(
                pl.BlockSpec((1, num_heads, ts, d), lambda b, t: (b, 0, t, 0)),
                pl.BlockSpec((1, num_heads, ts, d), lambda b, t: (b, 0, t, 0)),
                pl.BlockSpec((1, num_heads, ts, d), lambda b, t: (b, 0, t, 0)),
            ),
        ),
        compiler_params=pltpu.CompilerParams(
            dimension_semantics=("parallel", "parallel"),
            vmem_limit_bytes=_VMEM_LIMIT_BYTES,
        ),
    )(xm, xa, wm, wa, b_all)

    # ---- kernel 2: flash attention + fused output projection (channel-major) -
    out_cs = pl.pallas_call(
        functools.partial(_flash_attn_kernel, num_heads),
        out_shape=jax.ShapeDtypeStruct((B, Cm, S), f32),
        grid_spec=pltpu.PrefetchScalarGridSpec(
            num_scalar_prefetch=0,
            grid=(B, nq, nk),
            in_specs=[
                pl.BlockSpec((1, num_heads, tq, d), lambda b, qi, ki: (b, 0, qi, 0)),
                pl.BlockSpec((1, num_heads, tk, d), lambda b, qi, ki: (b, 0, ki, 0)),
                pl.BlockSpec((1, num_heads, tk, d), lambda b, qi, ki: (b, 0, ki, 0)),
                pl.BlockSpec((num_heads, Cm, d), lambda b, qi, ki: (0, 0, 0),
                             pipeline_mode=pl.Buffered(1)),
                pl.BlockSpec((Cm, 1), lambda b, qi, ki: (0, 0),
                             pipeline_mode=pl.Buffered(1)),
            ],
            out_specs=pl.BlockSpec((1, Cm, tq), lambda b, qi, ki: (b, 0, qi)),
            scratch_shapes=[
                pltpu.VMEM((num_heads, tq, 1), jnp.float32),   # running max
                pltpu.VMEM((num_heads, tq, 1), jnp.float32),   # running sum
                pltpu.VMEM((num_heads, tq, d), jnp.float32),   # PV accumulator
            ],
        ),
        compiler_params=pltpu.CompilerParams(
            dimension_semantics=("parallel", "parallel", "arbitrary"),
            vmem_limit_bytes=_VMEM_LIMIT_BYTES,
        ),
    )(q, k, v, w_fused_h, b_fused)

    return out_cs.reshape(B, Cm, H, W)                 # channel-major, free reshape


# ---------------------------------------------------------------------------
# Pure-JAX reference mirroring the PyTorch module (unfused, f32).
# ---------------------------------------------------------------------------
def reference_forward(feature_main, feature_aux, params, num_heads):
    B, Cm, H, W = feature_main.shape
    Ca = feature_aux.shape[1]
    C = Cm + Ca
    S = H * W
    depth = C // num_heads

    combined = jnp.concatenate([feature_main, feature_aux], axis=1)
    x = combined.reshape(B, C, S).transpose(0, 2, 1)                # (B, S, C)

    def lin(v, w, b):
        return v @ w.T + b

    q = lin(x, params["wq"], params["bq"])
    k = lin(x, params["wk"], params["bk"])
    v = lin(x, params["wv"], params["bv"])

    def split(t):
        return t.reshape(B, S, num_heads, depth).transpose(0, 2, 1, 3)

    qh, kh, vh = split(q), split(k), split(v)
    attn = jax.nn.softmax(
        jnp.einsum("bhqd,bhkd->bhqk", qh, kh) / math.sqrt(depth), axis=-1)
    o = jnp.einsum("bhqk,bhkd->bhqd", attn, vh)
    o = o.transpose(0, 2, 1, 3).reshape(B, S, C)
    o = lin(o, params["wo"], params["bo"])                          # (B, S, C)

    wc = params["wc"].reshape(Cm, C)
    y = o @ wc.T + params["bc"].reshape(1, 1, Cm)                   # (B, S, Cm)
    return y.transpose(0, 2, 1).reshape(B, Cm, H, W)


if __name__ == "__main__":
    B, Cm, Ca, H, W, num_heads = 2, 4, 4, 16, 16, 2
    C = Cm + Ca

    key = jax.random.PRNGKey(0)
    ks = jax.random.split(key, 12)

    params = {
        "wq": 0.1 * jax.random.normal(ks[0], (C, C), jnp.float32),
        "bq": 0.1 * jax.random.normal(ks[1], (C,), jnp.float32),
        "wk": 0.1 * jax.random.normal(ks[2], (C, C), jnp.float32),
        "bk": 0.1 * jax.random.normal(ks[3], (C,), jnp.float32),
        "wv": 0.1 * jax.random.normal(ks[4], (C, C), jnp.float32),
        "bv": 0.1 * jax.random.normal(ks[5], (C,), jnp.float32),
        "wo": 0.1 * jax.random.normal(ks[6], (C, C), jnp.float32),
        "bo": 0.1 * jax.random.normal(ks[7], (C,), jnp.float32),
        "wc": 0.1 * jax.random.normal(ks[8], (Cm, C, 1, 1), jnp.float32),
        "bc": 0.1 * jax.random.normal(ks[9], (Cm,), jnp.float32),
    }

    feature_main = jax.random.normal(ks[10], (B, Cm, H, W), jnp.float32)
    feature_aux = jax.random.normal(ks[11], (B, Ca, H, W), jnp.float32)

    # 128-token tiles so the test exercises multi-q-tile and multi-kv-tile
    # paths (S = 256 -> attention grid (2, 2, 2) with online softmax).
    out = feature_fusion_forward(feature_main, feature_aux, params, num_heads,
                                 token_tile=128, q_tile=128, kv_tile=128)
    out = jax.block_until_ready(out)

    ref = reference_forward(feature_main, feature_aux, params, num_heads)
    assert out.shape == (B, Cm, H, W)
    # bf16 MXU compute (f32 accumulation) -> looser tolerance than pure f32.
    assert jnp.allclose(out, ref, atol=2e-2, rtol=2e-2), "mismatch vs reference"

    print("KERNEL_OK")
</pallas_src>

<mosaic_0001>
module attributes {stable_mosaic.version = 11 : i64} {
  func.func @_qkv_proj_kernel(%arg0: i32, %arg1: i32, %arg2: memref<1x128x4xbf16, #tpu.memory_space<vmem>>, %arg3: memref<1x128x4xbf16, #tpu.memory_space<vmem>>, %arg4: memref<4x24xbf16, #tpu.memory_space<vmem>>, %arg5: memref<4x24xbf16, #tpu.memory_space<vmem>>, %arg6: memref<1x24xf32, #tpu.memory_space<vmem>>, %arg7: memref<1x2x128x4xbf16, #tpu.memory_space<vmem>>, %arg8: memref<1x2x128x4xbf16, #tpu.memory_space<vmem>>, %arg9: memref<1x2x128x4xbf16, #tpu.memory_space<vmem>>) attributes {dimension_semantics = [#tpu.dimension_semantics<parallel>, #tpu.dimension_semantics<parallel>], iteration_bounds = array<i64: 2, 2>, scalar_prefetch = 0 : i64, scratch_operands = 0 : i64, tpu.core_type = #tpu.core_type<tc>, window_params = [{transform_indices = @transform_0, window_bounds = array<i64: 1, 128, 4>}, {transform_indices = @transform_1, window_bounds = array<i64: 1, 128, 4>}, {pipeline_mode = #tpu.pipeline_mode<synchronous>, transform_indices = @transform_2, window_bounds = array<i64: 4, 24>}, {pipeline_mode = #tpu.pipeline_mode<synchronous>, transform_indices = @transform_3, window_bounds = array<i64: 4, 24>}, {pipeline_mode = #tpu.pipeline_mode<synchronous>, transform_indices = @transform_4, window_bounds = array<i64: 1, 24>}, {transform_indices = @transform_5, window_bounds = array<i64: 1, 2, 128, 4>}, {transform_indices = @transform_6, window_bounds = array<i64: 1, 2, 128, 4>}, {transform_indices = @transform_7, window_bounds = array<i64: 1, 2, 128, 4>}]} {
    %c0 = arith.constant 0 : index
    %c0_0 = arith.constant 0 : index
    %c0_1 = arith.constant 0 : index
    %0 = vector.load %arg2[%c0, %c0_0, %c0_1] : memref<1x128x4xbf16, #tpu.memory_space<vmem>>, vector<1x128x4xbf16>
    %1 = vector.shape_cast %0 : vector<1x128x4xbf16> to vector<128x4xbf16>
    %c0_2 = arith.constant 0 : index
    %c0_3 = arith.constant 0 : index
    %2 = vector.load %arg4[%c0_2, %c0_3] : memref<4x24xbf16, #tpu.memory_space<vmem>>, vector<4x24xbf16>
    %cst = arith.constant dense<0.000000e+00> : vector<128x24xf32>
    %3 = tpu.matmul %1, %2, %cst {dimension_numbers = #tpu.dot_dimension_numbers<[1], [0], [0], [1], [0, 0, 1, 1], [], []>} : vector<128x4xbf16>, vector<4x24xbf16>, vector<128x24xf32> -> vector<128x24xf32>
    %c0_4 = arith.constant 0 : index
    %c0_5 = arith.constant 0 : index
    %c0_6 = arith.constant 0 : index
    %4 = vector.load %arg3[%c0_4, %c0_5, %c0_6] : memref<1x128x4xbf16, #tpu.memory_space<vmem>>, vector<1x128x4xbf16>
    %5 = vector.shape_cast %4 : vector<1x128x4xbf16> to vector<128x4xbf16>
    %c0_7 = arith.constant 0 : index
    %c0_8 = arith.constant 0 : index
    %6 = vector.load %arg5[%c0_7, %c0_8] : memref<4x24xbf16, #tpu.memory_space<vmem>>, vector<4x24xbf16>
    %cst_9 = arith.constant dense<0.000000e+00> : vector<128x24xf32>
    %7 = tpu.matmul %5, %6, %cst_9 {dimension_numbers = #tpu.dot_dimension_numbers<[1], [0], [0], [1], [0, 0, 1, 1], [], []>} : vector<128x4xbf16>, vector<4x24xbf16>, vector<128x24xf32> -> vector<128x24xf32>
    %8 = arith.addf %3, %7 : vector<128x24xf32>
    %c0_10 = arith.constant 0 : index
    %c0_11 = arith.constant 0 : index
    %9 = vector.load %arg6[%c0_10, %c0_11] : memref<1x24xf32, #tpu.memory_space<vmem>>, vector<1x24xf32>
    %10 = vector.broadcast %9 : vector<1x24xf32> to vector<128x24xf32>
    %11 = arith.addf %8, %10 : vector<128x24xf32>
    %12 = vector.extract_strided_slice %11 {offsets = [0, 0], sizes = [128, 4], strides = [1, 1]} : vector<128x24xf32> to vector<128x4xf32>
    %13 = arith.truncf %12 : vector<128x4xf32> to vector<128x4xbf16>
    %c0_12 = arith.constant 0 : index
    %c0_13 = arith.constant 0 : index
    %c0_14 = arith.constant 0 : index
    %c0_15 = arith.constant 0 : index
    %14 = vector.load %arg7[%c0_12, %c0_13, %c0_14, %c0_15] : memref<1x2x128x4xbf16, #tpu.memory_space<vmem>>, vector<1x1x128x4xbf16>
    %15 = vector.shape_cast %14 : vector<1x1x128x4xbf16> to vector<128x4xbf16>
    %16 = vector.shape_cast %13 : vector<128x4xbf16> to vector<1x1x128x4xbf16>
    tpu.vector_store %arg7[%c0_12, %c0_13, %c0_14, %c0_15], %16 {strides = array<i32>} : memref<1x2x128x4xbf16, #tpu.memory_space<vmem>>, vector<1x1x128x4xbf16>,
    %17 = vector.extract_strided_slice %11 {offsets = [0, 8], sizes = [128, 4], strides = [1, 1]} : vector<128x24xf32> to vector<128x4xf32>
    %18 = arith.truncf %17 : vector<128x4xf32> to vector<128x4xbf16>
    %c0_16 = arith.constant 0 : index
    %c0_17 = arith.constant 0 : index
    %c0_18 = arith.constant 0 : index
    %c0_19 = arith.constant 0 : index
    %19 = vector.load %arg8[%c0_16, %c0_17, %c0_18, %c0_19] : memref<1x2x128x4xbf16, #tpu.memory_space<vmem>>, vector<1x1x128x4xbf16>
    %20 = vector.shape_cast %19 : vector<1x1x128x4xbf16> to vector<128x4xbf16>
    %21 = vector.shape_cast %18 : vector<128x4xbf16> to vector<1x1x128x4xbf16>
    tpu.vector_store %arg8[%c0_16, %c0_17, %c0_18, %c0_19], %21 {strides = array<i32>} : memref<1x2x128x4xbf16, #tpu.memory_space<vmem>>, vector<1x1x128x4xbf16>,
    %22 = vector.extract_strided_slice %11 {offsets = [0, 16], sizes = [128, 4], strides = [1, 1]} : vector<128x24xf32> to vector<128x4xf32>
    %23 = arith.truncf %22 : vector<128x4xf32> to vector<128x4xbf16>
    %c0_20 = arith.constant 0 : index
    %c0_21 = arith.constant 0 : index
    %c0_22 = arith.constant 0 : index
    %c0_23 = arith.constant 0 : index
    %24 = vector.load %arg9[%c0_20, %c0_21, %c0_22, %c0_23] : memref<1x2x128x4xbf16, #tpu.memory_space<vmem>>, vector<1x1x128x4xbf16>
    %25 = vector.shape_cast %24 : vector<1x1x128x4xbf16> to vector<128x4xbf16>
    %26 = vector.shape_cast %23 : vector<128x4xbf16> to vector<1x1x128x4xbf16>
    tpu.vector_store %arg9[%c0_20, %c0_21, %c0_22, %c0_23], %26 {strides = array<i32>} : memref<1x2x128x4xbf16, #tpu.memory_space<vmem>>, vector<1x1x128x4xbf16>,
    %27 = vector.extract_strided_slice %11 {offsets = [0, 4], sizes = [128, 4], strides = [1, 1]} : vector<128x24xf32> to vector<128x4xf32>
    %28 = arith.truncf %27 : vector<128x4xf32> to vector<128x4xbf16>
    %c0_24 = arith.constant 0 : index
    %c1 = arith.constant 1 : index
    %c0_25 = arith.constant 0 : index
    %c0_26 = arith.constant 0 : index
    %29 = vector.load %arg7[%c0_24, %c1, %c0_25, %c0_26] : memref<1x2x128x4xbf16, #tpu.memory_space<vmem>>, vector<1x1x128x4xbf16>
    %30 = vector.shape_cast %29 : vector<1x1x128x4xbf16> to vector<128x4xbf16>
    %31 = vector.shape_cast %28 : vector<128x4xbf16> to vector<1x1x128x4xbf16>
    tpu.vector_store %arg7[%c0_24, %c1, %c0_25, %c0_26], %31 {strides = array<i32>} : memref<1x2x128x4xbf16, #tpu.memory_space<vmem>>, vector<1x1x128x4xbf16>,
    %32 = vector.extract_strided_slice %11 {offsets = [0, 12], sizes = [128, 4], strides = [1, 1]} : vector<128x24xf32> to vector<128x4xf32>
    %33 = arith.truncf %32 : vector<128x4xf32> to vector<128x4xbf16>
    %c0_27 = arith.constant 0 : index
    %c1_28 = arith.constant 1 : index
    %c0_29 = arith.constant 0 : index
    %c0_30 = arith.constant 0 : index
    %34 = vector.load %arg8[%c0_27, %c1_28, %c0_29, %c0_30] : memref<1x2x128x4xbf16, #tpu.memory_space<vmem>>, vector<1x1x128x4xbf16>
    %35 = vector.shape_cast %34 : vector<1x1x128x4xbf16> to vector<128x4xbf16>
    %36 = vector.shape_cast %33 : vector<128x4xbf16> to vector<1x1x128x4xbf16>
    tpu.vector_store %arg8[%c0_27, %c1_28, %c0_29, %c0_30], %36 {strides = array<i32>} : memref<1x2x128x4xbf16, #tpu.memory_space<vmem>>, vector<1x1x128x4xbf16>,
    %37 = vector.extract_strided_slice %11 {offsets = [0, 20], sizes = [128, 4], strides = [1, 1]} : vector<128x24xf32> to vector<128x4xf32>
    %38 = arith.truncf %37 : vector<128x4xf32> to vector<128x4xbf16>
    %c0_31 = arith.constant 0 : index
    %c1_32 = arith.constant 1 : index
    %c0_33 = arith.constant 0 : index
    %c0_34 = arith.constant 0 : index
    %39 = vector.load %arg9[%c0_31, %c1_32, %c0_33, %c0_34] : memref<1x2x128x4xbf16, #tpu.memory_space<vmem>>, vector<1x1x128x4xbf16>
    %40 = vector.shape_cast %39 : vector<1x1x128x4xbf16> to vector<128x4xbf16>
    %41 = vector.shape_cast %38 : vector<128x4xbf16> to vector<1x1x128x4xbf16>
    tpu.vector_store %arg9[%c0_31, %c1_32, %c0_33, %c0_34], %41 {strides = array<i32>} : memref<1x2x128x4xbf16, #tpu.memory_space<vmem>>, vector<1x1x128x4xbf16>,
    return
  }
  func.func @transform_0(%arg0: i32, %arg1: i32) -> (i32, i32, i32) {
    %c0_i32 = arith.constant 0 : i32
    %c0_i32_0 = arith.constant 0 : i32
    return %arg0, %arg1, %c0_i32 : i32, i32, i32
  }
  func.func @transform_1(%arg0: i32, %arg1: i32) -> (i32, i32, i32) {
    %c0_i32 = arith.constant 0 : i32
    %c0_i32_0 = arith.constant 0 : i32
    return %arg0, %arg1, %c0_i32 : i32, i32, i32
  }
  func.func @transform_2(%arg0: i32, %arg1: i32) -> (i32, i32) {
    %c0_i32 = arith.constant 0 : i32
    %c0_i32_0 = arith.constant 0 : i32
    %c0_i32_1 = arith.constant 0 : i32
    return %c0_i32, %c0_i32_0 : i32, i32
  }
  func.func @transform_3(%arg0: i32, %arg1: i32) -> (i32, i32) {
    %c0_i32 = arith.constant 0 : i32
    %c0_i32_0 = arith.constant 0 : i32
    %c0_i32_1 = arith.constant 0 : i32
    return %c0_i32, %c0_i32_0 : i32, i32
  }
  func.func @transform_4(%arg0: i32, %arg1: i32) -> (i32, i32) {
    %c0_i32 = arith.constant 0 : i32
    %c0_i32_0 = arith.constant 0 : i32
    %c0_i32_1 = arith.constant 0 : i32
    return %c0_i32, %c0_i32_0 : i32, i32
  }
  func.func @transform_5(%arg0: i32, %arg1: i32) -> (i32, i32, i32, i32) {
    %c0_i32 = arith.constant 0 : i32
    %c0_i32_0 = arith.constant 0 : i32
    %c0_i32_1 = arith.constant 0 : i32
    return %arg0, %c0_i32, %arg1, %c0_i32_0 : i32, i32, i32, i32
  }
  func.func @transform_6(%arg0: i32, %arg1: i32) -> (i32, i32, i32, i32) {
    %c0_i32 = arith.constant 0 : i32
    %c0_i32_0 = arith.constant 0 : i32
    %c0_i32_1 = arith.constant 0 : i32
    return %arg0, %c0_i32, %arg1, %c0_i32_0 : i32, i32, i32, i32
  }
  func.func @transform_7(%arg0: i32, %arg1: i32) -> (i32, i32, i32, i32) {
    %c0_i32 = arith.constant 0 : i32
    %c0_i32_0 = arith.constant 0 : i32
    %c0_i32_1 = arith.constant 0 : i32
    return %arg0, %c0_i32, %arg1, %c0_i32_0 : i32, i32, i32, i32
  }
}

</mosaic_0001>

<llo_original>
// kernel: tpu_custom_call.1
$region0: #{tpu_custom_call.1}
  #allocation0 [shape = 'u32[]', space=smem, size = 0x4, offset = 0x4, fixed_abs, tag = 'smem constant byte address 0x4 - core index']
  #allocation1 [shape = 'u32[72,128]{1,0:T(1,128)}', space=vmem, size = 0x9000, scoped, tag = 'internal scratch']
  %s0 = inlined_call_operand.vmem [shape: bf16[2,256,4], index: 0, kind: input, shape index: {}]
  %s1 = inlined_call_operand.vmem [shape: bf16[2,256,4], index: 1, kind: input, shape index: {}]
  %s2 = inlined_call_operand.vmem [shape: bf16[4,24], index: 2, kind: input, shape index: {}]
  %s3 = inlined_call_operand.vmem [shape: bf16[4,24], index: 3, kind: input, shape index: {}]
  %s4 = inlined_call_operand.vmem [shape: f32[1,24], index: 4, kind: input, shape index: {}]
  %s5 = inlined_call_operand.vmem [shape: bf16[2,2,256,4], index: 5, kind: output, shape index: {0}]
  %s6 = inlined_call_operand.vmem [shape: bf16[2,2,256,4], index: 6, kind: output, shape index: {1}]
  %s7 = inlined_call_operand.vmem [shape: bf16[2,2,256,4], index: 7, kind: output, shape index: {2}]
  %8 = xla_tuple %s5, %s6, %s7
  %s9 = sld [smem:[#allocation0]]
  $region180: #{tpu_custom_call.1} parent=0
    _
  %s11 = ssub.s32 1, %s9
  %s12 = scalar_select 0, %s11, %s9
  $region1: #{tpu_custom_call.1} parent=0
    #allocation2 [shape = 'u8[131072]{0}', space=vmem, size = 0x20000, scoped, tag = 'output window, operand 0']
    #allocation3 [shape = 'u8[131072]{0}', space=vmem, size = 0x20000, scoped, tag = 'output window, operand 1']
    #allocation4 [shape = 'u8[131072]{0}', space=vmem, size = 0x20000, scoped, tag = 'output window, operand 2']
    loop: start=0, step=1, limit=6
    $region2: #{tpu_custom_call.1} parent=1 // loop_pre_header
      _
    $region3: #{tpu_custom_call.1} parent=1 // loop_header
      %s14 = sphi 0, %s18
      %p15 = scmp.ge.s32.totalorder %s14, 6
      %s21 = sphi 0, %s33
      %s22 = sphi 0, %s29
      %s23 = sphi 0, %s21
      %s24 = sphi 0, %s22
      %s25 = sphi 0, %s23
      %s26 = sphi 0, %s24
      %s38 = sphi 0, %s40
      %s41 = sphi 0, %s38
      %s42 = sphi 0, %s41
      %s58 = sphi 0, %s42
      %s66 = sphi 0, %s68
      %s69 = sphi 0, %s66
      %s70 = sphi 0, %s69
      %s86 = sphi 0, %s70
      %s90 = sphi 0, %s90
      %s92 = sphi 0, %s90
      %s93 = sphi 0, %s92
      %s107 = sphi 0, %s93
      %s111 = sphi 0, %s111
      %s113 = sphi 0, %s111
      %s114 = sphi 0, %s113
      %s128 = sphi 0, %s114
      %s132 = sphi 0, %s132
      %s134 = sphi 0, %s132
      %s135 = sphi 0, %s134
      %s149 = sphi 0, %s135
      %s157 = sphi 0, %s159
      %s160 = sphi 0, %s157
      %s161 = sphi 0, %s160
      %s177 = sphi 0, %s161
      %s185 = sphi 0, %s187
      %s188 = sphi 0, %s185
      %s189 = sphi 0, %s188
      %s205 = sphi 0, %s189
      %s213 = sphi 0, %s215
      %s216 = sphi 0, %s213
      %s217 = sphi 0, %s216
      %s233 = sphi 0, %s217
    $region4: #{tpu_custom_call.1} parent=1 // loop_header_branch
      %17 = sbr.rel (%p15) target = $region8
    $region5: #{tpu_custom_call.1} parent=1 // loop_body
      %s19 = ssub.s32 %s14, 1
      %s20 = ssub.s32 %s14, 2
      %s27 = sadd.s32 1, %s22
      %p28 = scmp.ge.s32.totalorder %s27, 2
      %s29 = scalar_select %p28, 0, %s27
      %s30 = sadd.s32 1, %s21
      %s31 = scalar_select %p28, %s30, %s21
      %p32 = scmp.ge.s32.totalorder %s31, 2
      %s33 = scalar_select %p32, 0, %s31
      %s34 = ssub.s32 %s21, %s33
      %s35 = ssub.s32 %s22, %s29
      %s36 = sor.u32 %s34, %s35
      %p37 = scmp.eq.s32.totalorder %s36, 0
      %s39 = sadd.s32 %s38, 1
      %s40 = scalar_select %p37, %s38, %s39
      %p43 = pneg %p37
      %p44 = scmp.eq.s32.totalorder %s14, 3
      %p45 = por %p43, %p44
      %p46 = scmp.ne.s32.totalorder %s38, %s41
      %p47 = scmp.eq.s32.totalorder %s14, 0
      %p48 = por %p46, %p47
      %p49 = scmp.ne.s32.totalorder %s38, %s41
      %p50 = scmp.eq.s32.totalorder %s19, 3
      %p51 = por %p49, %p50
      %p52 = scmp.ne.s32.totalorder %s41, %s42
      %p53 = scmp.eq.s32.totalorder %s19, 0
      %p54 = por %p52, %p53
      %p55 = scmp.ne.s32.totalorder %s41, %s42
      %p56 = scmp.eq.s32.totalorder %s20, 3
      %p57 = por %p55, %p56
      %p59 = scmp.ne.s32.totalorder %s42, %s58
      %p60 = scmp.eq.s32.totalorder %s20, 0
      %p61 = por %p59, %p60
      %s62 = ssub.s32 %s21, %s33
      %s63 = ssub.s32 %s22, %s29
      %s64 = sor.u32 %s62, %s63
      %p65 = scmp.eq.s32.totalorder %s64, 0
      %s67 = sadd.s32 %s66, 1
      %s68 = scalar_select %p65, %s66, %s67
      %p71 = pneg %p65
      %p72 = scmp.eq.s32.totalorder %s14, 3
      %p73 = por %p71, %p72
      %p74 = scmp.ne.s32.totalorder %s66, %s69
      %p75 = scmp.eq.s32.totalorder %s14, 0
      %p76 = por %p74, %p75
      %p77 = scmp.ne.s32.totalorder %s66, %s69
      %p78 = scmp.eq.s32.totalorder %s19, 3
      %p79 = por %p77, %p78
      %p80 = scmp.ne.s32.totalorder %s69, %s70
      %p81 = scmp.eq.s32.totalorder %s19, 0
      %p82 = por %p80, %p81
      %p83 = scmp.ne.s32.totalorder %s69, %s70
      %p84 = scmp.eq.s32.totalorder %s20, 3
      %p85 = por %p83, %p84
      %p87 = scmp.ne.s32.totalorder %s70, %s86
      %p88 = scmp.eq.s32.totalorder %s20, 0
      %p89 = por %p87, %p88
      %s91 = sadd.s32 %s90, 1
      %p94 = scmp.eq.s32.totalorder %s14, 3
      %p95 = scmp.ne.s32.totalorder %s90, %s92
      %p96 = scmp.eq.s32.totalorder %s14, 0
      %p97 = por %p95, %p96
      %p98 = scmp.ne.s32.totalorder %s90, %s92
      %p99 = scmp.eq.s32.totalorder %s19, 3
      %p100 = por %p98, %p99
      %p101 = scmp.ne.s32.totalorder %s92, %s93
      %p102 = scmp.eq.s32.totalorder %s19, 0
      %p103 = por %p101, %p102
      %p104 = scmp.ne.s32.totalorder %s92, %s93
      %p105 = scmp.eq.s32.totalorder %s20, 3
      %p106 = por %p104, %p105
      %p108 = scmp.ne.s32.totalorder %s93, %s107
      %p109 = scmp.eq.s32.totalorder %s20, 0
      %p110 = por %p108, %p109
      %s112 = sadd.s32 %s111, 1
      %p115 = scmp.eq.s32.totalorder %s14, 3
      %p116 = scmp.ne.s32.totalorder %s111, %s113
      %p117 = scmp.eq.s32.totalorder %s14, 0
      %p118 = por %p116, %p117
      %p119 = scmp.ne.s32.totalorder %s111, %s113
      %p120 = scmp.eq.s32.totalorder %s19, 3
      %p121 = por %p119, %p120
      %p122 = scmp.ne.s32.totalorder %s113, %s114
      %p123 = scmp.eq.s32.totalorder %s19, 0
      %p124 = por %p122, %p123
      %p125 = scmp.ne.s32.totalorder %s113, %s114
      %p126 = scmp.eq.s32.totalorder %s20, 3
      %p127 = por %p125, %p126
      %p129 = scmp.ne.s32.totalorder %s114, %s128
      %p130 = scmp.eq.s32.totalorder %s20, 0
      %p131 = por %p129, %p130
      %s133 = sadd.s32 %s132, 1
      %p136 = scmp.eq.s32.totalorder %s14, 3
      %p137 = scmp.ne.s32.totalorder %s132, %s134
      %p138 = scmp.eq.s32.totalorder %s14, 0
      %p139 = por %p137, %p138
      %p140 = scmp.ne.s32.totalorder %s132, %s134
      %p141 = scmp.eq.s32.totalorder %s19, 3
      %p142 = por %p140, %p141
      %p143 = scmp.ne.s32.totalorder %s134, %s135
      %p144 = scmp.eq.s32.totalorder %s19, 0
      %p145 = por %p143, %p144
      %p146 = scmp.ne.s32.totalorder %s134, %s135
      %p147 = scmp.eq.s32.totalorder %s20, 3
      %p148 = por %p146, %p147
      %p150 = scmp.ne.s32.totalorder %s135, %s149
      %p151 = scmp.eq.s32.totalorder %s20, 0
      %p152 = por %p150, %p151
      %s153 = ssub.s32 %s21, %s33
      %s154 = ssub.s32 %s22, %s29
      %s155 = sor.u32 %s153, %s154
      %p156 = scmp.eq.s32.totalorder %s155, 0
      %s158 = sadd.s32 %s157, 1
      %s159 = scalar_select %p156, %s157, %s158
      %p162 = pneg %p156
      %p163 = scmp.eq.s32.totalorder %s14, 3
      %p164 = por %p162, %p163
      %p165 = scmp.ne.s32.totalorder %s157, %s160
      %p166 = scmp.eq.s32.totalorder %s14, 0
      %p167 = por %p165, %p166
      %p168 = scmp.ne.s32.totalorder %s157, %s160
      %p169 = scmp.eq.s32.totalorder %s19, 3
      %p170 = por %p168, %p169
      %p171 = scmp.ne.s32.totalorder %s160, %s161
      %p172 = scmp.eq.s32.totalorder %s19, 0
      %p173 = por %p171, %p172
      %p174 = scmp.ne.s32.totalorder %s160, %s161
      %p175 = scmp.eq.s32.totalorder %s20, 3
      %p176 = por %p174, %p175
      %p178 = scmp.ne.s32.totalorder %s161, %s177
      %p179 = scmp.eq.s32.totalorder %s20, 0
      %p180 = por %p178, %p179
      %s181 = ssub.s32 %s21, %s33
      %s182 = ssub.s32 %s22, %s29
      %s183 = sor.u32 %s181, %s182
      %p184 = scmp.eq.s32.totalorder %s183, 0
      %s186 = sadd.s32 %s185, 1
      %s187 = scalar_select %p184, %s185, %s186
      %p190 = pneg %p184
      %p191 = scmp.eq.s32.totalorder %s14, 3
      %p192 = por %p190, %p191
      %p193 = scmp.ne.s32.totalorder %s185, %s188
      %p194 = scmp.eq.s32.totalorder %s14, 0
      %p195 = por %p193, %p194
      %p196 = scmp.ne.s32.totalorder %s185, %s188
      %p197 = scmp.eq.s32.totalorder %s19, 3
      %p198 = por %p196, %p197
      %p199 = scmp.ne.s32.totalorder %s188, %s189
      %p200 = scmp.eq.s32.totalorder %s19, 0
      %p201 = por %p199, %p200
      %p202 = scmp.ne.s32.totalorder %s188, %s189
      %p203 = scmp.eq.s32.totalorder %s20, 3
      %p204 = por %p202, %p203
      %p206 = scmp.ne.s32.totalorder %s189, %s205
      %p207 = scmp.eq.s32.totalorder %s20, 0
      %p208 = por %p206, %p207
      %s209 = ssub.s32 %s21, %s33
      %s210 = ssub.s32 %s22, %s29
      %s211 = sor.u32 %s209, %s210
      %p212 = scmp.eq.s32.totalorder %s211, 0
      %s214 = sadd.s32 %s213, 1
      %s215 = scalar_select %p212, %s213, %s214
      %p218 = pneg %p212
      %p219 = scmp.eq.s32.totalorder %s14, 3
      %p220 = por %p218, %p219
      %p221 = scmp.ne.s32.totalorder %s213, %s216
      %p222 = scmp.eq.s32.totalorder %s14, 0
      %p223 = por %p221, %p222
      %p224 = scmp.ne.s32.totalorder %s213, %s216
      %p225 = scmp.eq.s32.totalorder %s19, 3
      %p226 = por %p224, %p225
      %p227 = scmp.ne.s32.totalorder %s216, %s217
      %p228 = scmp.eq.s32.totalorder %s19, 0
      %p229 = por %p227, %p228
      %p230 = scmp.ne.s32.totalorder %s216, %s217
      %p231 = scmp.eq.s32.totalorder %s20, 3
      %p232 = por %p230, %p231
      %p234 = scmp.ne.s32.totalorder %s217, %s233
      %p235 = scmp.eq.s32.totalorder %s20, 0
      %p236 = por %p234, %p235
      %p237 = scmp.le.s32.totalorder 1, %s14
      %p238 = scmp.lt.s32.totalorder %s14, 5
      %p239 = pnand %p237, %p238
      %p240 = pneg %p239
      // Predicated region
      $region9: #{tpu_custom_call.1} parent=5 // pred_check
        _
      $region10: #{tpu_custom_call.1} parent=5 // pred_check_branch
        %242 = sbr.rel (%p239) target = $region12
      $region11: #{tpu_custom_call.1} parent=5 // pred_region
        %s243 = ssub.s32 %s14, 1
        // Predicated region
        $region13: #{tpu_custom_call.1} parent=11 // pred_check
          %p244 = pneg %p103
        $region14: #{tpu_custom_call.1} parent=11 // pred_check_branch
          %246 = sbr.rel (%p244) target = $region16
        $region15: #{tpu_custom_call.1} parent=11 // pred_region
          _
        $region16: #{tpu_custom_call.1} parent=11 // pred_fallthru
          _
        // Predicated region
        $region17: #{tpu_custom_call.1} parent=11 // pred_check
          %p247 = pneg %p124
        $region18: #{tpu_custom_call.1} parent=11 // pred_check_branch
          %249 = sbr.rel (%p247) target = $region20
        $region19: #{tpu_custom_call.1} parent=11 // pred_region
          _
        $region20: #{tpu_custom_call.1} parent=11 // pred_fallthru
          _
        // Predicated region
        $region21: #{tpu_custom_call.1} parent=11 // pred_check
          %p250 = pneg %p145
        $region22: #{tpu_custom_call.1} parent=11 // pred_check_branch
          %252 = sbr.rel (%p250) target = $region24
        $region23: #{tpu_custom_call.1} parent=11 // pred_region
          _
        $region24: #{tpu_custom_call.1} parent=11 // pred_fallthru
          _
      $region12: #{tpu_custom_call.1} parent=5 // pred_fallthru
        _
      %p253 = scmp.lt.s32.totalorder %s14, 4
      // Predicated region
      $region25: #{tpu_custom_call.1} parent=5 // pred_check
        %p254 = pneg %p253
      $region26: #{tpu_custom_call.1} parent=5 // pred_check_branch
        %256 = sbr.rel (%p254) target = $region28
      $region27: #{tpu_custom_call.1} parent=5 // pred_region
        // Predicated region
        $region29: #{tpu_custom_call.1} parent=27 // pred_check
          %p257 = pneg %p48
        $region30: #{tpu_custom_call.1} parent=27 // pred_check_branch
          %259 = sbr.rel (%p257) target = $region32
        $region31: #{tpu_custom_call.1} parent=27 // pred_region
          %s260 = smul.u32 16, %s22
          %p261 = scmp.lt.s32.totalorder %s21, 1
          %s262 = scalar_select %p261, %s21, 1
          %p263 = scmp.lt.s32.totalorder %s260, 31
          %s264 = scalar_select %p263, %s260, 31
          %s265 = smul.addr %s262, 32
          %s266 = sadd.s32 %s264, %s265
          %s267 = smul.addr %s266, 4
          %s268 = scalar_lea.vmem %s0, %s267
          %s269 = smul.u32 16, %s22
        $region32: #{tpu_custom_call.1} parent=27 // pred_fallthru
          _
        // Predicated region
        $region33: #{tpu_custom_call.1} parent=27 // pred_check
          %p270 = pneg %p76
        $region34: #{tpu_custom_call.1} parent=27 // pred_check_branch
          %272 = sbr.rel (%p270) target = $region36
        $region35: #{tpu_custom_call.1} parent=27 // pred_region
          %s273 = smul.u32 16, %s22
          %p274 = scmp.lt.s32.totalorder %s21, 1
          %s275 = scalar_select %p274, %s21, 1
          %p276 = scmp.lt.s32.totalorder %s273, 31
          %s277 = scalar_select %p276, %s273, 31
          %s278 = smul.addr %s275, 32
          %s279 = sadd.s32 %s277, %s278
          %s280 = smul.addr %s279, 4
          %s281 = scalar_lea.vmem %s1, %s280
          %s282 = smul.u32 16, %s22
        $region36: #{tpu_custom_call.1} parent=27 // pred_fallthru
          _
      $region28: #{tpu_custom_call.1} parent=5 // pred_fallthru
        _
      %p283 = scmp.le.s32.totalorder 1, %s14
      %p284 = scmp.lt.s32.totalorder %s14, 5
      %p285 = pnand %p283, %p284
      %p286 = pneg %p285
      // Predicated region
      $region37: #{tpu_custom_call.1} parent=5 // pred_check
        _
      $region38: #{tpu_custom_call.1} parent=5 // pred_check_branch
        %288 = sbr.rel (%p285) target = $region40
      $region39: #{tpu_custom_call.1} parent=5 // pred_region
        %s289 = ssub.s32 %s14, 1
        %s290 = smul.u32 16, %s24
        %p291 = scmp.lt.s32.totalorder %s23, 1
        %s292 = scalar_select %p291, %s23, 1
        %p293 = scmp.lt.s32.totalorder %s290, 31
        %s294 = scalar_select %p293, %s290, 31
        %s295 = smul.addr %s292, 32
        %s296 = sadd.s32 %s294, %s295
        %s297 = smul.addr %s296, 4
        %s298 = scalar_lea.vmem %s0, %s297
        %p299 = pneg %p54
        %p300 = pneg %p51
        %s301 = smul.u32 16, %s24
        %p302 = scmp.lt.s32.totalorder %s23, 1
        %s303 = scalar_select %p302, %s23, 1
        %p304 = scmp.lt.s32.totalorder %s301, 31
        %s305 = scalar_select %p304, %s301, 31
        %s306 = smul.addr %s303, 32
        %s307 = sadd.s32 %s305, %s306
        %s308 = smul.addr %s307, 4
        %s309 = scalar_lea.vmem %s1, %s308
        %p310 = pneg %p82
        %p311 = pneg %p79
        %p312 = pneg %p103
        %p313 = pneg %p100
        %p314 = pneg %p124
        %p315 = pneg %p121
        %p316 = pneg %p145
        %p317 = pneg %p142
        %p318 = pneg %p173
        %p319 = pneg %p170
        %s320 = sand.u32 %s160, 1
        %s321 = sand.u32 %s160, 1
        %s322 = smul.addr %s321, 128
        %s323 = scalar_lea.vmem [#allocation2], %s322
        %p324 = pneg %p201
        %p325 = pneg %p198
        %s326 = sand.u32 %s188, 1
        %s327 = sand.u32 %s188, 1
        %s328 = smul.addr %s327, 128
        %s329 = scalar_lea.vmem [#allocation3], %s328
        %p330 = pneg %p229
        %p331 = pneg %p226
        %s332 = sand.u32 %s216, 1
        %s333 = sand.u32 %s216, 1
        %s334 = smul.addr %s333, 128
        %s335 = scalar_lea.vmem [#allocation4], %s334
        %s336 = smul.u32 16, %s24
        %p337 = scmp.lt.s32.totalorder %s23, 1
        %s338 = scalar_select %p337, %s23, 1
        %p339 = scmp.lt.s32.totalorder %s336, 31
        %s340 = scalar_select %p339, %s336, 31
        %s341 = smul.addr %s338, 32
        %s342 = sadd.s32 %s340, %s341
        %s343 = smul.addr %s342, 4
        %s344 = scalar_lea.vmem %s0, %s343
        %s345 = smul.u32 16, %s24
        %s346 = smul.u32 16, %s24
        %p347 = scmp.lt.s32.totalorder %s23, 1
        %s348 = scalar_select %p347, %s23, 1
        %p349 = scmp.lt.s32.totalorder %s346, 31
        %s350 = scalar_select %p349, %s346, 31
        %s351 = smul.addr %s348, 32
        %s352 = sadd.s32 %s350, %s351
        %s353 = smul.addr %s352, 4
        %s354 = scalar_lea.vmem %s1, %s353
        %s355 = smul.u32 16, %s24
        %s356 = smul.u32 16, %s24
        %s357 = smul.u32 16, %s24
        %s358 = smul.u32 16, %s24
        %v360 = vld [vmem:[%s344] sm:$0xf]
        %v361 = vld [vmem:[%s344 + $0x4] sm:$0xf]
        %v362 = vld [vmem:[%s344 + $0x8] sm:$0xf]
        %v363 = vld [vmem:[%s344 + $0xc] sm:$0xf]
        %v364 = vld [vmem:[%s344 + $0x10] sm:$0xf]
        %v365 = vld [vmem:[%s344 + $0x14] sm:$0xf]
        %v366 = vld [vmem:[%s344 + $0x18] sm:$0xf]
        %v367 = vld [vmem:[%s344 + $0x1c] sm:$0xf]
        %v368 = vld [vmem:[%s344 + $0x20] sm:$0xf]
        %v369 = vld [vmem:[%s344 + $0x24] sm:$0xf]
        %v370 = vld [vmem:[%s344 + $0x28] sm:$0xf]
        %v371 = vld [vmem:[%s344 + $0x2c] sm:$0xf]
        %v372 = vld [vmem:[%s344 + $0x30] sm:$0xf]
        %v373 = vld [vmem:[%s344 + $0x34] sm:$0xf]
        %v374 = vld [vmem:[%s344 + $0x38] sm:$0xf]
        %v375 = vld [vmem:[%s344 + $0x3c] sm:$0xf]
        %v376 = vld [vmem:[%s2] sm:$0x3]
        %v377 = vld [vmem:[%s354] sm:$0xf]
        %v378 = vld [vmem:[%s354 + $0x4] sm:$0xf]
        %v379 = vld [vmem:[%s354 + $0x8] sm:$0xf]
        %v380 = vld [vmem:[%s354 + $0xc] sm:$0xf]
        %v381 = vld [vmem:[%s354 + $0x10] sm:$0xf]
        %v382 = vld [vmem:[%s354 + $0x14] sm:$0xf]
        %v383 = vld [vmem:[%s354 + $0x18] sm:$0xf]
        %v384 = vld [vmem:[%s354 + $0x1c] sm:$0xf]
        %v385 = vld [vmem:[%s354 + $0x20] sm:$0xf]
        %v386 = vld [vmem:[%s354 + $0x24] sm:$0xf]
        %v387 = vld [vmem:[%s354 + $0x28] sm:$0xf]
        %v388 = vld [vmem:[%s354 + $0x2c] sm:$0xf]
        %v389 = vld [vmem:[%s354 + $0x30] sm:$0xf]
        %v390 = vld [vmem:[%s354 + $0x34] sm:$0xf]
        %v391 = vld [vmem:[%s354 + $0x38] sm:$0xf]
        %v392 = vld [vmem:[%s354 + $0x3c] sm:$0xf]
        %v393 = vld [vmem:[%s3] sm:$0x3]
        %v410 = vunpack.c.l.b16 %v377
        %v411 = vunpack.c.l.b16 %v378
        %v412 = vunpack.c.l.b16 %v379
        %v413 = vunpack.c.l.b16 %v380
        %v414 = vunpack.c.l.b16 %v381
        %v415 = vunpack.c.l.b16 %v382
        %v416 = vunpack.c.l.b16 %v383
        %v417 = vunpack.c.l.b16 %v384
        %v418 = vunpack.c.l.b16 %v385
        %v419 = vunpack.c.l.b16 %v386
        %v420 = vunpack.c.l.b16 %v387
        %v421 = vunpack.c.l.b16 %v388
        %v422 = vunpack.c.l.b16 %v389
        %v423 = vunpack.c.l.b16 %v390
        %v424 = vunpack.c.l.b16 %v391
        %v425 = vunpack.c.l.b16 %v392
        %v426 = vpack.c.b16 %v411, %v410
        %v427 = vpack.c.b16 %v413, %v412
        %v428 = vpack.c.b16 %v415, %v414
        %v429 = vpack.c.b16 %v417, %v416
        %v430 = vpack.c.b16 %v419, %v418
        %v431 = vpack.c.b16 %v421, %v420
        %v432 = vpack.c.b16 %v423, %v422
        %v433 = vpack.c.b16 %v425, %v424
        %vm434 = vcmask 31744
        %v436 = vsel %vm434, %v426, 0
        %v439 = vsel %vm434, %v427, 0
        %v442 = vsel %vm434, %v428, 0
        %v445 = vsel %vm434, %v429, 0
        %v448 = vsel %vm434, %v430, 0
        %v451 = vsel %vm434, %v431, 0
        %v454 = vsel %vm434, %v432, 0
        %v457 = vsel %vm434, %v433, 0
        %vm459 = vcmask 1041408
        %v461 = vsel %vm459, %v393, 0
        %463 = vmatpush.bf16.msra.mxu0 0
        %464 = vmatpush.bf16.msra.mxu0 0
        %465 = vmatpush.bf16.msra.mxu0 0
        %466 = vmatpush.bf16.msra.mxu0 0
        %467 = vmatpush.bf16.msra.mxu0 0
        %468 = vmatpush.bf16.msra.mxu0 0
        %469 = vmatpush.bf16.msra.mxu0 0
        %470 = vmatpush.bf16.msra.mxu0 %v461
        %471 = vmatmul.bf16.gmra.mxu0 %v436
        %v472 = vpop.f32.mrf.mxu0
        %v473 = vadd.f32 0.0, %v472
        %v474 = vpop.f32.mrf.mxu0
        %v475 = vadd.f32 0.0, %v474
        %476 = vmatmul.bf16.gmra.mxu0 %v439
        %v477 = vpop.f32.mrf.mxu0
        %v478 = vadd.f32 0.0, %v477
        %v479 = vpop.f32.mrf.mxu0
        %v480 = vadd.f32 0.0, %v479
        %481 = vmatmul.bf16.gmra.mxu0 %v442
        %v482 = vpop.f32.mrf.mxu0
        %v483 = vadd.f32 0.0, %v482
        %v484 = vpop.f32.mrf.mxu0
        %v485 = vadd.f32 0.0, %v484
        %486 = vmatmul.bf16.gmra.mxu0 %v445
        %v487 = vpop.f32.mrf.mxu0
        %v488 = vadd.f32 0.0, %v487
        %v489 = vpop.f32.mrf.mxu0
        %v490 = vadd.f32 0.0, %v489
        %491 = vmatmul.bf16.gmra.mxu0 %v448
        %v492 = vpop.f32.mrf.mxu0
        %v493 = vadd.f32 0.0, %v492
        %v494 = vpop.f32.mrf.mxu0
        %v495 = vadd.f32 0.0, %v494
        %496 = vmatmul.bf16.gmra.mxu0 %v451
        %v497 = vpop.f32.mrf.mxu0
        %v498 = vadd.f32 0.0, %v497
        %v499 = vpop.f32.mrf.mxu0
        %v500 = vadd.f32 0.0, %v499
        %501 = vmatmul.bf16.gmra.mxu0 %v454
        %v502 = vpop.f32.mrf.mxu0
        %v503 = vadd.f32 0.0, %v502
        %v504 = vpop.f32.mrf.mxu0
        %v505 = vadd.f32 0.0, %v504
        %506 = vmatmul.bf16.gmra.mxu0 %v457
        %v507 = vpop.f32.mrf.mxu0
        %v508 = vadd.f32 0.0, %v507
        %v509 = vpop.f32.mrf.mxu0
        %v510 = vadd.f32 0.0, %v509
        %511 = vdwg.mxu0
        %v528 = vunpack.c.l.b16 %v360
        %v529 = vunpack.c.l.b16 %v361
        %v530 = vunpack.c.l.b16 %v362
        %v531 = vunpack.c.l.b16 %v363
        %v532 = vunpack.c.l.b16 %v364
        %v533 = vunpack.c.l.b16 %v365
        %v534 = vunpack.c.l.b16 %v366
        %v535 = vunpack.c.l.b16 %v367
        %v536 = vunpack.c.l.b16 %v368
        %v537 = vunpack.c.l.b16 %v369
        %v538 = vunpack.c.l.b16 %v370
        %v539 = vunpack.c.l.b16 %v371
        %v540 = vunpack.c.l.b16 %v372
        %v541 = vunpack.c.l.b16 %v373
        %v542 = vunpack.c.l.b16 %v374
        %v543 = vunpack.c.l.b16 %v375
        %v544 = vpack.c.b16 %v529, %v528
        %v545 = vpack.c.b16 %v531, %v530
        %v546 = vpack.c.b16 %v533, %v532
        %v547 = vpack.c.b16 %v535, %v534
        %v548 = vpack.c.b16 %v537, %v536
        %v549 = vpack.c.b16 %v539, %v538
        %v550 = vpack.c.b16 %v541, %v540
        %v551 = vpack.c.b16 %v543, %v542
        %v553 = vsel %vm434, %v544, 0
        %v556 = vsel %vm434, %v545, 0
        %v559 = vsel %vm434, %v546, 0
        %v562 = vsel %vm434, %v547, 0
        %v565 = vsel %vm434, %v548, 0
        %v568 = vsel %vm434, %v549, 0
        %v571 = vsel %vm434, %v550, 0
        %v574 = vsel %vm434, %v551, 0
        %v577 = vsel %vm459, %v376, 0
        %579 = vmatpush.bf16.msra.mxu0 0
        %580 = vmatpush.bf16.msra.mxu0 0
        %581 = vmatpush.bf16.msra.mxu0 0
        %582 = vmatpush.bf16.msra.mxu0 0
        %583 = vmatpush.bf16.msra.mxu0 0
        %584 = vmatpush.bf16.msra.mxu0 0
        %585 = vmatpush.bf16.msra.mxu0 0
        %586 = vmatpush.bf16.msra.mxu0 %v577
        %587 = vmatmul.bf16.gmra.mxu0 %v553
        %v588 = vpop.f32.mrf.mxu0
        %v589 = vadd.f32 %v473, %v588
        %v590 = vpop.f32.mrf.mxu0
        %v591 = vadd.f32 %v475, %v590
        %592 = vmatmul.bf16.gmra.mxu0 %v556
        %v593 = vpop.f32.mrf.mxu0
        %v594 = vadd.f32 %v478, %v593
        %v595 = vpop.f32.mrf.mxu0
        %v596 = vadd.f32 %v480, %v595
        %597 = vmatmul.bf16.gmra.mxu0 %v559
        %v598 = vpop.f32.mrf.mxu0
        %v599 = vadd.f32 %v483, %v598
        %v600 = vpop.f32.mrf.mxu0
        %v601 = vadd.f32 %v485, %v600
        %602 = vmatmul.bf16.gmra.mxu0 %v562
        %v603 = vpop.f32.mrf.mxu0
        %v604 = vadd.f32 %v488, %v603
        %v605 = vpop.f32.mrf.mxu0
        %v606 = vadd.f32 %v490, %v605
        %607 = vmatmul.bf16.gmra.mxu0 %v565
        %v608 = vpop.f32.mrf.mxu0
        %v609 = vadd.f32 %v493, %v608
        %v610 = vpop.f32.mrf.mxu0
        %v611 = vadd.f32 %v495, %v610
        %612 = vmatmul.bf16.gmra.mxu0 %v568
        %v613 = vpop.f32.mrf.mxu0
        %v614 = vadd.f32 %v498, %v613
        %v615 = vpop.f32.mrf.mxu0
        %v616 = vadd.f32 %v500, %v615
        %617 = vmatmul.bf16.gmra.mxu0 %v571
        %v618 = vpop.f32.mrf.mxu0
        %v619 = vadd.f32 %v503, %v618
        %v620 = vpop.f32.mrf.mxu0
        %v621 = vadd.f32 %v505, %v620
        %622 = vmatmul.bf16.gmra.mxu0 %v574
        %v623 = vpop.f32.mrf.mxu0
        %v624 = vadd.f32 %v508, %v623
        %v625 = vpop.f32.mrf.mxu0
        %v626 = vadd.f32 %v510, %v625
        %627 = vdwg.mxu0
        %v628 = vld [vmem:[%s4] sm:$0x1]
        %v630 = vperm.slane %v628, 0
        %v632 = vadd.f32 %v589, %v630
        %v633 = vadd.f32 %v591, %v630
        %v634 = vadd.f32 %v594, %v630
        %v635 = vadd.f32 %v596, %v630
        %v636 = vadd.f32 %v599, %v630
        %v637 = vadd.f32 %v601, %v630
        %v638 = vadd.f32 %v604, %v630
        %v639 = vadd.f32 %v606, %v630
        %v640 = vadd.f32 %v609, %v630
        %v641 = vadd.f32 %v611, %v630
        %v642 = vadd.f32 %v614, %v630
        %v643 = vadd.f32 %v616, %v630
        %v644 = vadd.f32 %v619, %v630
        %v645 = vadd.f32 %v621, %v630
        %v646 = vadd.f32 %v624, %v630
        %v647 = vadd.f32 %v626, %v630
        %v648 = vpack.c.bf16 %v632, %v632
        %v649 = vpack.c.bf16 %v633, %v633
        %v650 = vpack.c.bf16 %v634, %v634
        %v651 = vpack.c.bf16 %v635, %v635
        %v652 = vpack.c.bf16 %v636, %v636
        %v653 = vpack.c.bf16 %v637, %v637
        %v654 = vpack.c.bf16 %v638, %v638
        %v655 = vpack.c.bf16 %v639, %v639
        %v656 = vpack.c.bf16 %v640, %v640
        %v657 = vpack.c.bf16 %v641, %v641
        %v658 = vpack.c.bf16 %v642, %v642
        %v659 = vpack.c.bf16 %v643, %v643
        %v660 = vpack.c.bf16 %v644, %v644
        %v661 = vpack.c.bf16 %v645, %v645
        %v662 = vpack.c.bf16 %v646, %v646
        %v663 = vpack.c.bf16 %v647, %v647
        %vm664 = vcmask 27648
        %665 = vst.msk [vmem:[%s323] sm:$0xf] %vm664, %v648
        %666 = vst.msk [vmem:[%s323 + $0x4] sm:$0xf] %vm664, %v649
        %667 = vst.msk [vmem:[%s323 + $0x8] sm:$0xf] %vm664, %v650
        %668 = vst.msk [vmem:[%s323 + $0xc] sm:$0xf] %vm664, %v651
        %669 = vst.msk [vmem:[%s323 + $0x10] sm:$0xf] %vm664, %v652
        %670 = vst.msk [vmem:[%s323 + $0x14] sm:$0xf] %vm664, %v653
        %671 = vst.msk [vmem:[%s323 + $0x18] sm:$0xf] %vm664, %v654
        %672 = vst.msk [vmem:[%s323 + $0x1c] sm:$0xf] %vm664, %v655
        %673 = vst.msk [vmem:[%s323 + $0x20] sm:$0xf] %vm664, %v656
        %674 = vst.msk [vmem:[%s323 + $0x24] sm:$0xf] %vm664, %v657
        %675 = vst.msk [vmem:[%s323 + $0x28] sm:$0xf] %vm664, %v658
        %676 = vst.msk [vmem:[%s323 + $0x2c] sm:$0xf] %vm664, %v659
        %677 = vst.msk [vmem:[%s323 + $0x30] sm:$0xf] %vm664, %v660
        %678 = vst.msk [vmem:[%s323 + $0x34] sm:$0xf] %vm664, %v661
        %679 = vst.msk [vmem:[%s323 + $0x38] sm:$0xf] %vm664, %v662
        %680 = vst.msk [vmem:[%s323 + $0x3c] sm:$0xf] %vm664, %v663
        %697 = vrot.lane.b32.xlu0 %v648, 120
        %v698 = vpop.permute.xlu0 %697
        %699 = vrot.lane.b32.xlu0 %v649, 120
        %v700 = vpop.permute.xlu0 %699
        %701 = vrot.lane.b32.xlu0 %v650, 120
        %v702 = vpop.permute.xlu0 %701
        %703 = vrot.lane.b32.xlu0 %v651, 120
        %v704 = vpop.permute.xlu0 %703
        %705 = vrot.lane.b32.xlu0 %v652, 120
        %v706 = vpop.permute.xlu0 %705
        %707 = vrot.lane.b32.xlu0 %v653, 120
        %v708 = vpop.permute.xlu0 %707
        %709 = vrot.lane.b32.xlu0 %v654, 120
        %v710 = vpop.permute.xlu0 %709
        %711 = vrot.lane.b32.xlu0 %v655, 120
        %v712 = vpop.permute.xlu0 %711
        %713 = vrot.lane.b32.xlu0 %v656, 120
        %v714 = vpop.permute.xlu0 %713
        %715 = vrot.lane.b32.xlu0 %v657, 120
        %v716 = vpop.permute.xlu0 %715
        %717 = vrot.lane.b32.xlu0 %v658, 120
        %v718 = vpop.permute.xlu0 %717
        %719 = vrot.lane.b32.xlu0 %v659, 120
        %v720 = vpop.permute.xlu0 %719
        %721 = vrot.lane.b32.xlu0 %v660, 120
        %v722 = vpop.permute.xlu0 %721
        %723 = vrot.lane.b32.xlu0 %v661, 120
        %v724 = vpop.permute.xlu0 %723
        %725 = vrot.lane.b32.xlu0 %v662, 120
        %v726 = vpop.permute.xlu0 %725
        %727 = vrot.lane.b32.xlu0 %v663, 120
        %v728 = vpop.permute.xlu0 %727
        %745 = vst.msk [vmem:[%s329] sm:$0xf] %vm664, %v698
        %746 = vst.msk [vmem:[%s329 + $0x4] sm:$0xf] %vm664, %v700
        %747 = vst.msk [vmem:[%s329 + $0x8] sm:$0xf] %vm664, %v702
        %748 = vst.msk [vmem:[%s329 + $0xc] sm:$0xf] %vm664, %v704
        %749 = vst.msk [vmem:[%s329 + $0x10] sm:$0xf] %vm664, %v706
        %750 = vst.msk [vmem:[%s329 + $0x14] sm:$0xf] %vm664, %v708
        %751 = vst.msk [vmem:[%s329 + $0x18] sm:$0xf] %vm664, %v710
        %752 = vst.msk [vmem:[%s329 + $0x1c] sm:$0xf] %vm664, %v712
        %753 = vst.msk [vmem:[%s329 + $0x20] sm:$0xf] %vm664, %v714
        %754 = vst.msk [vmem:[%s329 + $0x24] sm:$0xf] %vm664, %v716
        %755 = vst.msk [vmem:[%s329 + $0x28] sm:$0xf] %vm664, %v718
        %756 = vst.msk [vmem:[%s329 + $0x2c] sm:$0xf] %vm664, %v720
        %757 = vst.msk [vmem:[%s329 + $0x30] sm:$0xf] %vm664, %v722
        %758 = vst.msk [vmem:[%s329 + $0x34] sm:$0xf] %vm664, %v724
        %759 = vst.msk [vmem:[%s329 + $0x38] sm:$0xf] %vm664, %v726
        %760 = vst.msk [vmem:[%s329 + $0x3c] sm:$0xf] %vm664, %v728
        %761 = vrot.lane.b32.xlu0 %v648, 112
        %v762 = vpop.permute.xlu0 %761
        %763 = vrot.lane.b32.xlu0 %v649, 112
        %v764 = vpop.permute.xlu0 %763
        %765 = vrot.lane.b32.xlu0 %v650, 112
        %v766 = vpop.permute.xlu0 %765
        %767 = vrot.lane.b32.xlu0 %v651, 112
        %v768 = vpop.permute.xlu0 %767
        %769 = vrot.lane.b32.xlu0 %v652, 112
        %v770 = vpop.permute.xlu0 %769
        %771 = vrot.lane.b32.xlu0 %v653, 112
        %v772 = vpop.permute.xlu0 %771
        %773 = vrot.lane.b32.xlu0 %v654, 112
        %v774 = vpop.permute.xlu0 %773
        %775 = vrot.lane.b32.xlu0 %v655, 112
        %v776 = vpop.permute.xlu0 %775
        %777 = vrot.lane.b32.xlu0 %v656, 112
        %v778 = vpop.permute.xlu0 %777
        %779 = vrot.lane.b32.xlu0 %v657, 112
        %v780 = vpop.permute.xlu0 %779
        %781 = vrot.lane.b32.xlu0 %v658, 112
        %v782 = vpop.permute.xlu0 %781
        %783 = vrot.lane.b32.xlu0 %v659, 112
        %v784 = vpop.permute.xlu0 %783
        %785 = vrot.lane.b32.xlu0 %v660, 112
        %v786 = vpop.permute.xlu0 %785
        %787 = vrot.lane.b32.xlu0 %v661, 112
        %v788 = vpop.permute.xlu0 %787
        %789 = vrot.lane.b32.xlu0 %v662, 112
        %v790 = vpop.permute.xlu0 %789
        %791 = vrot.lane.b32.xlu0 %v663, 112
        %v792 = vpop.permute.xlu0 %791
        %809 = vst.msk [vmem:[%s335] sm:$0xf] %vm664, %v762
        %810 = vst.msk [vmem:[%s335 + $0x4] sm:$0xf] %vm664, %v764
        %811 = vst.msk [vmem:[%s335 + $0x8] sm:$0xf] %vm664, %v766
        %812 = vst.msk [vmem:[%s335 + $0xc] sm:$0xf] %vm664, %v768
        %813 = vst.msk [vmem:[%s335 + $0x10] sm:$0xf] %vm664, %v770
        %814 = vst.msk [vmem:[%s335 + $0x14] sm:$0xf] %vm664, %v772
        %815 = vst.msk [vmem:[%s335 + $0x18] sm:$0xf] %vm664, %v774
        %816 = vst.msk [vmem:[%s335 + $0x1c] sm:$0xf] %vm664, %v776
        %817 = vst.msk [vmem:[%s335 + $0x20] sm:$0xf] %vm664, %v778
        %818 = vst.msk [vmem:[%s335 + $0x24] sm:$0xf] %vm664, %v780
        %819 = vst.msk [vmem:[%s335 + $0x28] sm:$0xf] %vm664, %v782
        %820 = vst.msk [vmem:[%s335 + $0x2c] sm:$0xf] %vm664, %v784
        %821 = vst.msk [vmem:[%s335 + $0x30] sm:$0xf] %vm664, %v786
        %822 = vst.msk [vmem:[%s335 + $0x34] sm:$0xf] %vm664, %v788
        %823 = vst.msk [vmem:[%s335 + $0x38] sm:$0xf] %vm664, %v790
        %824 = vst.msk [vmem:[%s335 + $0x3c] sm:$0xf] %vm664, %v792
        %825 = vrot.lane.b32.xlu0 %v648, 124
        %v826 = vpop.permute.xlu0 %825
        %827 = vrot.lane.b32.xlu0 %v649, 124
        %v828 = vpop.permute.xlu0 %827
        %829 = vrot.lane.b32.xlu0 %v650, 124
        %v830 = vpop.permute.xlu0 %829
        %831 = vrot.lane.b32.xlu0 %v651, 124
        %v832 = vpop.permute.xlu0 %831
        %833 = vrot.lane.b32.xlu0 %v652, 124
        %v834 = vpop.permute.xlu0 %833
        %835 = vrot.lane.b32.xlu0 %v653, 124
        %v836 = vpop.permute.xlu0 %835
        %837 = vrot.lane.b32.xlu0 %v654, 124
        %v838 = vpop.permute.xlu0 %837
        %839 = vrot.lane.b32.xlu0 %v655, 124
        %v840 = vpop.permute.xlu0 %839
        %841 = vrot.lane.b32.xlu0 %v656, 124
        %v842 = vpop.permute.xlu0 %841
        %843 = vrot.lane.b32.xlu0 %v657, 124
        %v844 = vpop.permute.xlu0 %843
        %845 = vrot.lane.b32.xlu0 %v658, 124
        %v846 = vpop.permute.xlu0 %845
        %847 = vrot.lane.b32.xlu0 %v659, 124
        %v848 = vpop.permute.xlu0 %847
        %849 = vrot.lane.b32.xlu0 %v660, 124
        %v850 = vpop.permute.xlu0 %849
        %851 = vrot.lane.b32.xlu0 %v661, 124
        %v852 = vpop.permute.xlu0 %851
        %853 = vrot.lane.b32.xlu0 %v662, 124
        %v854 = vpop.permute.xlu0 %853
        %855 = vrot.lane.b32.xlu0 %v663, 124
        %v856 = vpop.permute.xlu0 %855
        %s873 = scalar_lea.vmem %s323, 64 [#allocation2]
        %874 = vst.msk [vmem:[%s873] sm:$0xf] %vm664, %v826
        %875 = vst.msk [vmem:[%s873 + $0x4] sm:$0xf] %vm664, %v828
        %876 = vst.msk [vmem:[%s873 + $0x8] sm:$0xf] %vm664, %v830
        %877 = vst.msk [vmem:[%s873 + $0xc] sm:$0xf] %vm664, %v832
        %878 = vst.msk [vmem:[%s873 + $0x10] sm:$0xf] %vm664, %v834
        %879 = vst.msk [vmem:[%s873 + $0x14] sm:$0xf] %vm664, %v836
        %880 = vst.msk [vmem:[%s873 + $0x18] sm:$0xf] %vm664, %v838
        %881 = vst.msk [vmem:[%s873 + $0x1c] sm:$0xf] %vm664, %v840
        %882 = vst.msk [vmem:[%s873 + $0x20] sm:$0xf] %vm664, %v842
        %883 = vst.msk [vmem:[%s873 + $0x24] sm:$0xf] %vm664, %v844
        %884 = vst.msk [vmem:[%s873 + $0x28] sm:$0xf] %vm664, %v846
        %885 = vst.msk [vmem:[%s873 + $0x2c] sm:$0xf] %vm664, %v848
        %886 = vst.msk [vmem:[%s873 + $0x30] sm:$0xf] %vm664, %v850
        %887 = vst.msk [vmem:[%s873 + $0x34] sm:$0xf] %vm664, %v852
        %888 = vst.msk [vmem:[%s873 + $0x38] sm:$0xf] %vm664, %v854
        %889 = vst.msk [vmem:[%s873 + $0x3c] sm:$0xf] %vm664, %v856
        %890 = vrot.lane.b32.xlu0 %v648, 116
        %v891 = vpop.permute.xlu0 %890
        %892 = vrot.lane.b32.xlu0 %v649, 116
        %v893 = vpop.permute.xlu0 %892
        %894 = vrot.lane.b32.xlu0 %v650, 116
        %v895 = vpop.permute.xlu0 %894
        %896 = vrot.lane.b32.xlu0 %v651, 116
        %v897 = vpop.permute.xlu0 %896
        %898 = vrot.lane.b32.xlu0 %v652, 116
        %v899 = vpop.permute.xlu0 %898
        %900 = vrot.lane.b32.xlu0 %v653, 116
        %v901 = vpop.permute.xlu0 %900
        %902 = vrot.lane.b32.xlu0 %v654, 116
        %v903 = vpop.permute.xlu0 %902
        %904 = vrot.lane.b32.xlu0 %v655, 116
        %v905 = vpop.permute.xlu0 %904
        %906 = vrot.lane.b32.xlu0 %v656, 116
        %v907 = vpop.permute.xlu0 %906
        %908 = vrot.lane.b32.xlu0 %v657, 116
        %v909 = vpop.permute.xlu0 %908
        %910 = vrot.lane.b32.xlu0 %v658, 116
        %v911 = vpop.permute.xlu0 %910
        %912 = vrot.lane.b32.xlu0 %v659, 116
        %v913 = vpop.permute.xlu0 %912
        %914 = vrot.lane.b32.xlu0 %v660, 116
        %v915 = vpop.permute.xlu0 %914
        %916 = vrot.lane.b32.xlu0 %v661, 116
        %v917 = vpop.permute.xlu0 %916
        %918 = vrot.lane.b32.xlu0 %v662, 116
        %v919 = vpop.permute.xlu0 %918
        %920 = vrot.lane.b32.xlu0 %v663, 116
        %v921 = vpop.permute.xlu0 %920
        %s938 = scalar_lea.vmem %s329, 64 [#allocation3]
        %939 = vst.msk [vmem:[%s938] sm:$0xf] %vm664, %v891
        %940 = vst.msk [vmem:[%s938 + $0x4] sm:$0xf] %vm664, %v893
        %941 = vst.msk [vmem:[%s938 + $0x8] sm:$0xf] %vm664, %v895
        %942 = vst.msk [vmem:[%s938 + $0xc] sm:$0xf] %vm664, %v897
        %943 = vst.msk [vmem:[%s938 + $0x10] sm:$0xf] %vm664, %v899
        %944 = vst.msk [vmem:[%s938 + $0x14] sm:$0xf] %vm664, %v901
        %945 = vst.msk [vmem:[%s938 + $0x18] sm:$0xf] %vm664, %v903
        %946 = vst.msk [vmem:[%s938 + $0x1c] sm:$0xf] %vm664, %v905
        %947 = vst.msk [vmem:[%s938 + $0x20] sm:$0xf] %vm664, %v907
        %948 = vst.msk [vmem:[%s938 + $0x24] sm:$0xf] %vm664, %v909
        %949 = vst.msk [vmem:[%s938 + $0x28] sm:$0xf] %vm664, %v911
        %950 = vst.msk [vmem:[%s938 + $0x2c] sm:$0xf] %vm664, %v913
        %951 = vst.msk [vmem:[%s938 + $0x30] sm:$0xf] %vm664, %v915
        %952 = vst.msk [vmem:[%s938 + $0x34] sm:$0xf] %vm664, %v917
        %953 = vst.msk [vmem:[%s938 + $0x38] sm:$0xf] %vm664, %v919
        %954 = vst.msk [vmem:[%s938 + $0x3c] sm:$0xf] %vm664, %v921
        %955 = vrot.lane.b32.xlu0 %v648, 108
        %v956 = vpop.permute.xlu0 %955
        %957 = vrot.lane.b32.xlu0 %v649, 108
        %v958 = vpop.permute.xlu0 %957
        %959 = vrot.lane.b32.xlu0 %v650, 108
        %v960 = vpop.permute.xlu0 %959
        %961 = vrot.lane.b32.xlu0 %v651, 108
        %v962 = vpop.permute.xlu0 %961
        %963 = vrot.lane.b32.xlu0 %v652, 108
        %v964 = vpop.permute.xlu0 %963
        %965 = vrot.lane.b32.xlu0 %v653, 108
        %v966 = vpop.permute.xlu0 %965
        %967 = vrot.lane.b32.xlu0 %v654, 108
        %v968 = vpop.permute.xlu0 %967
        %969 = vrot.lane.b32.xlu0 %v655, 108
        %v970 = vpop.permute.xlu0 %969
        %971 = vrot.lane.b32.xlu0 %v656, 108
        %v972 = vpop.permute.xlu0 %971
        %973 = vrot.lane.b32.xlu0 %v657, 108
        %v974 = vpop.permute.xlu0 %973
        %975 = vrot.lane.b32.xlu0 %v658, 108
        %v976 = vpop.permute.xlu0 %975
        %977 = vrot.lane.b32.xlu0 %v659, 108
        %v978 = vpop.permute.xlu0 %977
        %979 = vrot.lane.b32.xlu0 %v660, 108
        %v980 = vpop.permute.xlu0 %979
        %981 = vrot.lane.b32.xlu0 %v661, 108
        %v982 = vpop.permute.xlu0 %981
        %983 = vrot.lane.b32.xlu0 %v662, 108
        %v984 = vpop.permute.xlu0 %983
        %985 = vrot.lane.b32.xlu0 %v663, 108
        %v986 = vpop.permute.xlu0 %985
        %s1003 = scalar_lea.vmem %s335, 64 [#allocation4]
        %1004 = vst.msk [vmem:[%s1003] sm:$0xf] %vm664, %v956
        %1005 = vst.msk [vmem:[%s1003 + $0x4] sm:$0xf] %vm664, %v958
        %1006 = vst.msk [vmem:[%s1003 + $0x8] sm:$0xf] %vm664, %v960
        %1007 = vst.msk [vmem:[%s1003 + $0xc] sm:$0xf] %vm664, %v962
        %1008 = vst.msk [vmem:[%s1003 + $0x10] sm:$0xf] %vm664, %v964
        %1009 = vst.msk [vmem:[%s1003 + $0x14] sm:$0xf] %vm664, %v966
        %1010 = vst.msk [vmem:[%s1003 + $0x18] sm:$0xf] %vm664, %v968
        %1011 = vst.msk [vmem:[%s1003 + $0x1c] sm:$0xf] %vm664, %v970
        %1012 = vst.msk [vmem:[%s1003 + $0x20] sm:$0xf] %vm664, %v972
        %1013 = vst.msk [vmem:[%s1003 + $0x24] sm:$0xf] %vm664, %v974
        %1014 = vst.msk [vmem:[%s1003 + $0x28] sm:$0xf] %vm664, %v976
        %1015 = vst.msk [vmem:[%s1003 + $0x2c] sm:$0xf] %vm664, %v978
        %1016 = vst.msk [vmem:[%s1003 + $0x30] sm:$0xf] %vm664, %v980
        %1017 = vst.msk [vmem:[%s1003 + $0x34] sm:$0xf] %vm664, %v982
        %1018 = vst.msk [vmem:[%s1003 + $0x38] sm:$0xf] %vm664, %v984
        %1019 = vst.msk [vmem:[%s1003 + $0x3c] sm:$0xf] %vm664, %v986
        %s1020 = sand.u32 %s160, 1
        %s1021 = sand.u32 %s160, 1
        %s1022 = smul.addr %s1021, 128
        %s1023 = scalar_lea.vmem [#allocation2], %s1022
        %s1024 = sand.u32 %s188, 1
        %s1025 = sand.u32 %s188, 1
        %s1026 = smul.addr %s1025, 128
        %s1027 = scalar_lea.vmem [#allocation3], %s1026
        %s1028 = sand.u32 %s216, 1
        %s1029 = sand.u32 %s216, 1
        %s1030 = smul.addr %s1029, 128
        %s1031 = scalar_lea.vmem [#allocation4], %s1030
        // Predicated region
        $region41: #{tpu_custom_call.1} parent=39 // pred_check
          %p1032 = pneg %p170
        $region42: #{tpu_custom_call.1} parent=39 // pred_check_branch
          %1034 = sbr.rel (%p1032) target = $region44
        $region43: #{tpu_custom_call.1} parent=39 // pred_region
          %s1035 = smul.u32 16, %s24
          %s1036 = smul.addr %s23, 64
          %s1037 = sadd.s32 %s1035, %s1036
          %s1038 = smul.addr %s1037, 4
          %s1039 = scalar_lea.vmem %s5, %s1038
          // Predicated region
          $region45: #{tpu_custom_call.1} parent=43 // pred_check
            _
          $region46: #{tpu_custom_call.1} parent=43 // pred_check_branch
            %1041 = sbr.rel (0) target = $region48
          $region47: #{tpu_custom_call.1} parent=43 // pred_region
            // Predicated region
            $region49: #{tpu_custom_call.1} parent=47 // pred_check
              _
            $region50: #{tpu_custom_call.1} parent=47 // pred_check_branch
              %1043 = sbr.rel target = $region52
            $region51: #{tpu_custom_call.1} parent=47 // pred_region
              // Predicated region
              $region64: #{tpu_custom_call.1} parent=51 // pred_check
                _
              $region65: #{tpu_custom_call.1} parent=51 // pred_check_branch
                %1121 = sbr.rel (0) target = $region67
              $region66: #{tpu_custom_call.1} parent=51 // pred_region
                loop: start=0, step=1, limit=1
                $region68: #{tpu_custom_call.1} parent=66 // loop_pre_header
                  _
                $region69: #{tpu_custom_call.1} parent=66 // loop_header
                  %s1123 = sphi 0, %s1127
                  %p1124 = scmp.ge.s32.totalorder %s1123, 1
                  %s1128 = sphi %s1023, %s1023
                  %s1129 = sphi %s1039, %s1039
                $region70: #{tpu_custom_call.1} parent=66 // loop_header_branch
                  %1126 = sbr.rel (%p1124) target = $region74
                $region71: #{tpu_custom_call.1} parent=66 // loop_body
                  _
                $region72: #{tpu_custom_call.1} parent=66 // loop_footer
                  %s1127 = sadd.s32 1, %s1123
                $region73: #{tpu_custom_call.1} parent=66 // loop_footer_branch
                  %1122 = sbr.rel target = $region69
                $region74: #{tpu_custom_call.1} parent=66 // loop_exit
                  _
                %s1131 = ssub.s32 16, 1
                loop: start=0, step=1, limit=1
                $region75: #{tpu_custom_call.1} parent=66 // loop_pre_header
                  _
                $region76: #{tpu_custom_call.1} parent=66 // loop_header
                  %s1133 = sphi 0, %s1137
                  %p1134 = scmp.ge.s32.totalorder %s1133, 1
                  %s1138 = sphi %s1023, %s1023
                  %s1139 = sphi %s1039, %s1039
                $region77: #{tpu_custom_call.1} parent=66 // loop_header_branch
                  %1136 = sbr.rel (%p1134) target = $region81
                $region78: #{tpu_custom_call.1} parent=66 // loop_body
                  %v1140 = vld [vmem:[%s1138] sm:%s1131]
                  %1141 = vst [vmem:[%s1139] sm:%s1131] %v1140
                  %v1142 = vld [vmem:[%s1138 + $0x4] sm:%s1131]
                  %1143 = vst [vmem:[%s1139 + $0x4] sm:%s1131] %v1142
                  %v1144 = vld [vmem:[%s1138 + $0x8] sm:%s1131]
                  %1145 = vst [vmem:[%s1139 + $0x8] sm:%s1131] %v1144
                  %v1146 = vld [vmem:[%s1138 + $0xc] sm:%s1131]
                  %1147 = vst [vmem:[%s1139 + $0xc] sm:%s1131] %v1146
                  %v1148 = vld [vmem:[%s1138 + $0x10] sm:%s1131]
                  %1149 = vst [vmem:[%s1139 + $0x10] sm:%s1131] %v1148
                  %v1150 = vld [vmem:[%s1138 + $0x14] sm:%s1131]
                  %1151 = vst [vmem:[%s1139 + $0x14] sm:%s1131] %v1150
                  %v1152 = vld [vmem:[%s1138 + $0x18] sm:%s1131]
                  %1153 = vst [vmem:[%s1139 + $0x18] sm:%s1131] %v1152
                  %v1154 = vld [vmem:[%s1138 + $0x1c] sm:%s1131]
                  %1155 = vst [vmem:[%s1139 + $0x1c] sm:%s1131] %v1154
                  %v1156 = vld [vmem:[%s1138 + $0x20] sm:%s1131]
                  %1157 = vst [vmem:[%s1139 + $0x20] sm:%s1131] %v1156
                  %v1158 = vld [vmem:[%s1138 + $0x24] sm:%s1131]
                  %1159 = vst [vmem:[%s1139 + $0x24] sm:%s1131] %v1158
                  %v1160 = vld [vmem:[%s1138 + $0x28] sm:%s1131]
                  %1161 = vst [vmem:[%s1139 + $0x28] sm:%s1131] %v1160
                  %v1162 = vld [vmem:[%s1138 + $0x2c] sm:%s1131]
                  %1163 = vst [vmem:[%s1139 + $0x2c] sm:%s1131] %v1162
                  %v1164 = vld [vmem:[%s1138 + $0x30] sm:%s1131]
                  %1165 = vst [vmem:[%s1139 + $0x30] sm:%s1131] %v1164
                  %v1166 = vld [vmem:[%s1138 + $0x34] sm:%s1131]
                  %1167 = vst [vmem:[%s1139 + $0x34] sm:%s1131] %v1166
                  %v1168 = vld [vmem:[%s1138 + $0x38] sm:%s1131]
                  %1169 = vst [vmem:[%s1139 + $0x38] sm:%s1131] %v1168
                  %v1170 = vld [vmem:[%s1138 + $0x3c] sm:%s1131]
                  %1171 = vst [vmem:[%s1139 + $0x3c] sm:%s1131] %v1170
                  %v1172 = vld [vmem:[%s1138 + $0x40] sm:%s1131]
                  %1173 = vst [vmem:[%s1139 + $0x80] sm:%s1131] %v1172
                  %v1174 = vld [vmem:[%s1138 + $0x44] sm:%s1131]
                  %1175 = vst [vmem:[%s1139 + $0x84] sm:%s1131] %v1174
                  %v1176 = vld [vmem:[%s1138 + $0x48] sm:%s1131]
                  %1177 = vst [vmem:[%s1139 + $0x88] sm:%s1131] %v1176
                  %v1178 = vld [vmem:[%s1138 + $0x4c] sm:%s1131]
                  %1179 = vst [vmem:[%s1139 + $0x8c] sm:%s1131] %v1178
                  %v1180 = vld [vmem:[%s1138 + $0x50] sm:%s1131]
                  %1181 = vst [vmem:[%s1139 + $0x90] sm:%s1131] %v1180
                  %v1182 = vld [vmem:[%s1138 + $0x54] sm:%s1131]
                  %1183 = vst [vmem:[%s1139 + $0x94] sm:%s1131] %v1182
                  %v1184 = vld [vmem:[%s1138 + $0x58] sm:%s1131]
                  %1185 = vst [vmem:[%s1139 + $0x98] sm:%s1131] %v1184
                  %v1186 = vld [vmem:[%s1138 + $0x5c] sm:%s1131]
                  %1187 = vst [vmem:[%s1139 + $0x9c] sm:%s1131] %v1186
                  %v1188 = vld [vmem:[%s1138 + $0x60] sm:%s1131]
                  %1189 = vst [vmem:[%s1139 + $0xa0] sm:%s1131] %v1188
                  %v1190 = vld [vmem:[%s1138 + $0x64] sm:%s1131]
                  %1191 = vst [vmem:[%s1139 + $0xa4] sm:%s1131] %v1190
                  %v1192 = vld [vmem:[%s1138 + $0x68] sm:%s1131]
                  %1193 = vst [vmem:[%s1139 + $0xa8] sm:%s1131] %v1192
                  %v1194 = vld [vmem:[%s1138 + $0x6c] sm:%s1131]
                  %1195 = vst [vmem:[%s1139 + $0xac] sm:%s1131] %v1194
                  %v1196 = vld [vmem:[%s1138 + $0x70] sm:%s1131]
                  %1197 = vst [vmem:[%s1139 + $0xb0] sm:%s1131] %v1196
                  %v1198 = vld [vmem:[%s1138 + $0x74] sm:%s1131]
                  %1199 = vst [vmem:[%s1139 + $0xb4] sm:%s1131] %v1198
                  %v1200 = vld [vmem:[%s1138 + $0x78] sm:%s1131]
                  %1201 = vst [vmem:[%s1139 + $0xb8] sm:%s1131] %v1200
                  %v1202 = vld [vmem:[%s1138 + $0x7c] sm:%s1131]
                  %1203 = vst [vmem:[%s1139 + $0xbc] sm:%s1131] %v1202
                $region79: #{tpu_custom_call.1} parent=66 // loop_footer
                  %s1137 = sadd.s32 1, %s1133
                $region80: #{tpu_custom_call.1} parent=66 // loop_footer_branch
                  %1132 = sbr.rel target = $region76
                $region81: #{tpu_custom_call.1} parent=66 // loop_exit
                  _
              $region67: #{tpu_custom_call.1} parent=51 // pred_fallthru
                _
            $region52: #{tpu_custom_call.1} parent=47 // pred_fallthru
              _
            // Predicated region
            $region53: #{tpu_custom_call.1} parent=47 // pred_check
              _
            $region54: #{tpu_custom_call.1} parent=47 // pred_check_branch
              %1045 = sbr.rel (0) target = $region56
            $region55: #{tpu_custom_call.1} parent=47 // pred_region
              %s1047 = ssub.s32 16, 1
              loop: start=0, step=1, limit=1
              $region57: #{tpu_custom_call.1} parent=55 // loop_pre_header
                _
              $region58: #{tpu_custom_call.1} parent=55 // loop_header
                %s1049 = sphi 0, %s1053
                %p1050 = scmp.ge.s32.totalorder %s1049, 1
                %s1054 = sphi %s1023, %s1023
                %s1055 = sphi %s1039, %s1039
              $region59: #{tpu_custom_call.1} parent=55 // loop_header_branch
                %1052 = sbr.rel (%p1050) target = $region63
              $region60: #{tpu_custom_call.1} parent=55 // loop_body
                %v1056 = vld [vmem:[%s1054] sm:%s1047]
                %1057 = vst [vmem:[%s1055] sm:%s1047] %v1056
                %v1058 = vld [vmem:[%s1054 + $0x4] sm:%s1047]
                %1059 = vst [vmem:[%s1055 + $0x4] sm:%s1047] %v1058
                %v1060 = vld [vmem:[%s1054 + $0x8] sm:%s1047]
                %1061 = vst [vmem:[%s1055 + $0x8] sm:%s1047] %v1060
                %v1062 = vld [vmem:[%s1054 + $0xc] sm:%s1047]
                %1063 = vst [vmem:[%s1055 + $0xc] sm:%s1047] %v1062
                %v1064 = vld [vmem:[%s1054 + $0x10] sm:%s1047]
                %1065 = vst [vmem:[%s1055 + $0x10] sm:%s1047] %v1064
                %v1066 = vld [vmem:[%s1054 + $0x14] sm:%s1047]
                %1067 = vst [vmem:[%s1055 + $0x14] sm:%s1047] %v1066
                %v1068 = vld [vmem:[%s1054 + $0x18] sm:%s1047]
                %1069 = vst [vmem:[%s1055 + $0x18] sm:%s1047] %v1068
                %v1070 = vld [vmem:[%s1054 + $0x1c] sm:%s1047]
                %1071 = vst [vmem:[%s1055 + $0x1c] sm:%s1047] %v1070
                %v1072 = vld [vmem:[%s1054 + $0x20] sm:%s1047]
                %1073 = vst [vmem:[%s1055 + $0x20] sm:%s1047] %v1072
                %v1074 = vld [vmem:[%s1054 + $0x24] sm:%s1047]
                %1075 = vst [vmem:[%s1055 + $0x24] sm:%s1047] %v1074
                %v1076 = vld [vmem:[%s1054 + $0x28] sm:%s1047]
                %1077 = vst [vmem:[%s1055 + $0x28] sm:%s1047] %v1076
                %v1078 = vld [vmem:[%s1054 + $0x2c] sm:%s1047]
                %1079 = vst [vmem:[%s1055 + $0x2c] sm:%s1047] %v1078
                %v1080 = vld [vmem:[%s1054 + $0x30] sm:%s1047]
                %1081 = vst [vmem:[%s1055 + $0x30] sm:%s1047] %v1080
                %v1082 = vld [vmem:[%s1054 + $0x34] sm:%s1047]
                %1083 = vst [vmem:[%s1055 + $0x34] sm:%s1047] %v1082
                %v1084 = vld [vmem:[%s1054 + $0x38] sm:%s1047]
                %1085 = vst [vmem:[%s1055 + $0x38] sm:%s1047] %v1084
                %v1086 = vld [vmem:[%s1054 + $0x3c] sm:%s1047]
                %1087 = vst [vmem:[%s1055 + $0x3c] sm:%s1047] %v1086
                %v1088 = vld [vmem:[%s1054 + $0x40] sm:%s1047]
                %1089 = vst [vmem:[%s1055 + $0x80] sm:%s1047] %v1088
                %v1090 = vld [vmem:[%s1054 + $0x44] sm:%s1047]
                %1091 = vst [vmem:[%s1055 + $0x84] sm:%s1047] %v1090
                %v1092 = vld [vmem:[%s1054 + $0x48] sm:%s1047]
                %1093 = vst [vmem:[%s1055 + $0x88] sm:%s1047] %v1092
                %v1094 = vld [vmem:[%s1054 + $0x4c] sm:%s1047]
                %1095 = vst [vmem:[%s1055 + $0x8c] sm:%s1047] %v1094
                %v1096 = vld [vmem:[%s1054 + $0x50] sm:%s1047]
                %1097 = vst [vmem:[%s1055 + $0x90] sm:%s1047] %v1096
                %v1098 = vld [vmem:[%s1054 + $0x54] sm:%s1047]
                %1099 = vst [vmem:[%s1055 + $0x94] sm:%s1047] %v1098
                %v1100 = vld [vmem:[%s1054 + $0x58] sm:%s1047]
                %1101 = vst [vmem:[%s1055 + $0x98] sm:%s1047] %v1100
                %v1102 = vld [vmem:[%s1054 + $0x5c] sm:%s1047]
                %1103 = vst [vmem:[%s1055 + $0x9c] sm:%s1047] %v1102
                %v1104 = vld [vmem:[%s1054 + $0x60] sm:%s1047]
                %1105 = vst [vmem:[%s1055 + $0xa0] sm:%s1047] %v1104
                %v1106 = vld [vmem:[%s1054 + $0x64] sm:%s1047]
                %1107 = vst [vmem:[%s1055 + $0xa4] sm:%s1047] %v1106
                %v1108 = vld [vmem:[%s1054 + $0x68] sm:%s1047]
                %1109 = vst [vmem:[%s1055 + $0xa8] sm:%s1047] %v1108
                %v1110 = vld [vmem:[%s1054 + $0x6c] sm:%s1047]
                %1111 = vst [vmem:[%s1055 + $0xac] sm:%s1047] %v1110
                %v1112 = vld [vmem:[%s1054 + $0x70] sm:%s1047]
                %1113 = vst [vmem:[%s1055 + $0xb0] sm:%s1047] %v1112
                %v1114 = vld [vmem:[%s1054 + $0x74] sm:%s1047]
                %1115 = vst [vmem:[%s1055 + $0xb4] sm:%s1047] %v1114
                %v1116 = vld [vmem:[%s1054 + $0x78] sm:%s1047]
                %1117 = vst [vmem:[%s1055 + $0xb8] sm:%s1047] %v1116
                %v1118 = vld [vmem:[%s1054 + $0x7c] sm:%s1047]
                %1119 = vst [vmem:[%s1055 + $0xbc] sm:%s1047] %v1118
              $region61: #{tpu_custom_call.1} parent=55 // loop_footer
                %s1053 = sadd.s32 1, %s1049
              $region62: #{tpu_custom_call.1} parent=55 // loop_footer_branch
                %1048 = sbr.rel target = $region58
              $region63: #{tpu_custom_call.1} parent=55 // loop_exit
                _
            $region56: #{tpu_custom_call.1} parent=47 // pred_fallthru
              _
          $region48: #{tpu_custom_call.1} parent=43 // pred_fallthru
            _
          %1204 = vnop
        $region44: #{tpu_custom_call.1} parent=39 // pred_fallthru
          _
        // Predicated region
        $region82: #{tpu_custom_call.1} parent=39 // pred_check
          %p1205 = pneg %p198
        $region83: #{tpu_custom_call.1} parent=39 // pred_check_branch
          %1207 = sbr.rel (%p1205) target = $region85
        $region84: #{tpu_custom_call.1} parent=39 // pred_region
          %s1208 = smul.u32 16, %s24
          %s1209 = smul.addr %s23, 64
          %s1210 = sadd.s32 %s1208, %s1209
          %s1211 = smul.addr %s1210, 4
          %s1212 = scalar_lea.vmem %s6, %s1211
          // Predicated region
          $region86: #{tpu_custom_call.1} parent=84 // pred_check
            _
          $region87: #{tpu_custom_call.1} parent=84 // pred_check_branch
            %1214 = sbr.rel (0) target = $region89
          $region88: #{tpu_custom_call.1} parent=84 // pred_region
            // Predicated region
            $region90: #{tpu_custom_call.1} parent=88 // pred_check
              _
            $region91: #{tpu_custom_call.1} parent=88 // pred_check_branch
              %1216 = sbr.rel target = $region93
            $region92: #{tpu_custom_call.1} parent=88 // pred_region
              // Predicated region
              $region105: #{tpu_custom_call.1} parent=92 // pred_check
                _
              $region106: #{tpu_custom_call.1} parent=92 // pred_check_branch
                %1294 = sbr.rel (0) target = $region108
              $region107: #{tpu_custom_call.1} parent=92 // pred_region
                loop: start=0, step=1, limit=1
                $region109: #{tpu_custom_call.1} parent=107 // loop_pre_header
                  _
                $region110: #{tpu_custom_call.1} parent=107 // loop_header
                  %s1296 = sphi 0, %s1300
                  %p1297 = scmp.ge.s32.totalorder %s1296, 1
                  %s1301 = sphi %s1027, %s1027
                  %s1302 = sphi %s1212, %s1212
                $region111: #{tpu_custom_call.1} parent=107 // loop_header_branch
                  %1299 = sbr.rel (%p1297) target = $region115
                $region112: #{tpu_custom_call.1} parent=107 // loop_body
                  _
                $region113: #{tpu_custom_call.1} parent=107 // loop_footer
                  %s1300 = sadd.s32 1, %s1296
                $region114: #{tpu_custom_call.1} parent=107 // loop_footer_branch
                  %1295 = sbr.rel target = $region110
                $region115: #{tpu_custom_call.1} parent=107 // loop_exit
                  _
                %s1304 = ssub.s32 16, 1
                loop: start=0, step=1, limit=1
                $region116: #{tpu_custom_call.1} parent=107 // loop_pre_header
                  _
                $region117: #{tpu_custom_call.1} parent=107 // loop_header
                  %s1306 = sphi 0, %s1310
                  %p1307 = scmp.ge.s32.totalorder %s1306, 1
                  %s1311 = sphi %s1027, %s1027
                  %s1312 = sphi %s1212, %s1212
                $region118: #{tpu_custom_call.1} parent=107 // loop_header_branch
                  %1309 = sbr.rel (%p1307) target = $region122
                $region119: #{tpu_custom_call.1} parent=107 // loop_body
                  %v1313 = vld [vmem:[%s1311] sm:%s1304]
                  %1314 = vst [vmem:[%s1312] sm:%s1304] %v1313
                  %v1315 = vld [vmem:[%s1311 + $0x4] sm:%s1304]
                  %1316 = vst [vmem:[%s1312 + $0x4] sm:%s1304] %v1315
                  %v1317 = vld [vmem:[%s1311 + $0x8] sm:%s1304]
                  %1318 = vst [vmem:[%s1312 + $0x8] sm:%s1304] %v1317
                  %v1319 = vld [vmem:[%s1311 + $0xc] sm:%s1304]
                  %1320 = vst [vmem:[%s1312 + $0xc] sm:%s1304] %v1319
                  %v1321 = vld [vmem:[%s1311 + $0x10] sm:%s1304]
                  %1322 = vst [vmem:[%s1312 + $0x10] sm:%s1304] %v1321
                  %v1323 = vld [vmem:[%s1311 + $0x14] sm:%s1304]
                  %1324 = vst [vmem:[%s1312 + $0x14] sm:%s1304] %v1323
                  %v1325 = vld [vmem:[%s1311 + $0x18] sm:%s1304]
                  %1326 = vst [vmem:[%s1312 + $0x18] sm:%s1304] %v1325
                  %v1327 = vld [vmem:[%s1311 + $0x1c] sm:%s1304]
                  %1328 = vst [vmem:[%s1312 + $0x1c] sm:%s1304] %v1327
                  %v1329 = vld [vmem:[%s1311 + $0x20] sm:%s1304]
                  %1330 = vst [vmem:[%s1312 + $0x20] sm:%s1304] %v1329
                  %v1331 = vld [vmem:[%s1311 + $0x24] sm:%s1304]
                  %1332 = vst [vmem:[%s1312 + $0x24] sm:%s1304] %v1331
                  %v1333 = vld [vmem:[%s1311 + $0x28] sm:%s1304]
                  %1334 = vst [vmem:[%s1312 + $0x28] sm:%s1304] %v1333
                  %v1335 = vld [vmem:[%s1311 + $0x2c] sm:%s1304]
                  %1336 = vst [vmem:[%s1312 + $0x2c] sm:%s1304] %v1335
                  %v1337 = vld [vmem:[%s1311 + $0x30] sm:%s1304]
                  %1338 = vst [vmem:[%s1312 + $0x30] sm:%s1304] %v1337
                  %v1339 = vld [vmem:[%s1311 + $0x34] sm:%s1304]
                  %1340 = vst [vmem:[%s1312 + $0x34] sm:%s1304] %v1339
                  %v1341 = vld [vmem:[%s1311 + $0x38] sm:%s1304]
                  %1342 = vst [vmem:[%s1312 + $0x38] sm:%s1304] %v1341
                  %v1343 = vld [vmem:[%s1311 + $0x3c] sm:%s1304]
                  %1344 = vst [vmem:[%s1312 + $0x3c] sm:%s1304] %v1343
                  %v1345 = vld [vmem:[%s1311 + $0x40] sm:%s1304]
                  %1346 = vst [vmem:[%s1312 + $0x80] sm:%s1304] %v1345
                  %v1347 = vld [vmem:[%s1311 + $0x44] sm:%s1304]
                  %1348 = vst [vmem:[%s1312 + $0x84] sm:%s1304] %v1347
                  %v1349 = vld [vmem:[%s1311 + $0x48] sm:%s1304]
                  %1350 = vst [vmem:[%s1312 + $0x88] sm:%s1304] %v1349
                  %v1351 = vld [vmem:[%s1311 + $0x4c] sm:%s1304]
                  %1352 = vst [vmem:[%s1312 + $0x8c] sm:%s1304] %v1351
                  %v1353 = vld [vmem:[%s1311 + $0x50] sm:%s1304]
                  %1354 = vst [vmem:[%s1312 + $0x90] sm:%s1304] %v1353
                  %v1355 = vld [vmem:[%s1311 + $0x54] sm:%s1304]
                  %1356 = vst [vmem:[%s1312 + $0x94] sm:%s1304] %v1355
                  %v1357 = vld [vmem:[%s1311 + $0x58] sm:%s1304]
                  %1358 = vst [vmem:[%s1312 + $0x98] sm:%s1304] %v1357
                  %v1359 = vld [vmem:[%s1311 + $0x5c] sm:%s1304]
                  %1360 = vst [vmem:[%s1312 + $0x9c] sm:%s1304] %v1359
                  %v1361 = vld [vmem:[%s1311 + $0x60] sm:%s1304]
                  %1362 = vst [vmem:[%s1312 + $0xa0] sm:%s1304] %v1361
                  %v1363 = vld [vmem:[%s1311 + $0x64] sm:%s1304]
                  %1364 = vst [vmem:[%s1312 + $0xa4] sm:%s1304] %v1363
                  %v1365 = vld [vmem:[%s1311 + $0x68] sm:%s1304]
                  %1366 = vst [vmem:[%s1312 + $0xa8] sm:%s1304] %v1365
                  %v1367 = vld [vmem:[%s1311 + $0x6c] sm:%s1304]
                  %1368 = vst [vmem:[%s1312 + $0xac] sm:%s1304] %v1367
                  %v1369 = vld [vmem:[%s1311 + $0x70] sm:%s1304]
                  %1370 = vst [vmem:[%s1312 + $0xb0] sm:%s1304] %v1369
                  %v1371 = vld [vmem:[%s1311 + $0x74] sm:%s1304]
                  %1372 = vst [vmem:[%s1312 + $0xb4] sm:%s1304] %v1371
                  %v1373 = vld [vmem:[%s1311 + $0x78] sm:%s1304]
                  %1374 = vst [vmem:[%s1312 + $0xb8] sm:%s1304] %v1373
                  %v1375 = vld [vmem:[%s1311 + $0x7c] sm:%s1304]
                  %1376 = vst [vmem:[%s1312 + $0xbc] sm:%s1304] %v1375
                $region120: #{tpu_custom_call.1} parent=107 // loop_footer
                  %s1310 = sadd.s32 1, %s1306
                $region121: #{tpu_custom_call.1} parent=107 // loop_footer_branch
                  %1305 = sbr.rel target = $region117
                $region122: #{tpu_custom_call.1} parent=107 // loop_exit
                  _
              $region108: #{tpu_custom_call.1} parent=92 // pred_fallthru
                _
            $region93: #{tpu_custom_call.1} parent=88 // pred_fallthru
              _
            // Predicated region
            $region94: #{tpu_custom_call.1} parent=88 // pred_check
              _
            $region95: #{tpu_custom_call.1} parent=88 // pred_check_branch
              %1218 = sbr.rel (0) target = $region97
            $region96: #{tpu_custom_call.1} parent=88 // pred_region
              %s1220 = ssub.s32 16, 1
              loop: start=0, step=1, limit=1
              $region98: #{tpu_custom_call.1} parent=96 // loop_pre_header
                _
              $region99: #{tpu_custom_call.1} parent=96 // loop_header
                %s1222 = sphi 0, %s1226
                %p1223 = scmp.ge.s32.totalorder %s1222, 1
                %s1227 = sphi %s1027, %s1027
                %s1228 = sphi %s1212, %s1212
              $region100: #{tpu_custom_call.1} parent=96 // loop_header_branch
                %1225 = sbr.rel (%p1223) target = $region104
              $region101: #{tpu_custom_call.1} parent=96 // loop_body
                %v1229 = vld [vmem:[%s1227] sm:%s1220]
                %1230 = vst [vmem:[%s1228] sm:%s1220] %v1229
                %v1231 = vld [vmem:[%s1227 + $0x4] sm:%s1220]
                %1232 = vst [vmem:[%s1228 + $0x4] sm:%s1220] %v1231
                %v1233 = vld [vmem:[%s1227 + $0x8] sm:%s1220]
                %1234 = vst [vmem:[%s1228 + $0x8] sm:%s1220] %v1233
                %v1235 = vld [vmem:[%s1227 + $0xc] sm:%s1220]
                %1236 = vst [vmem:[%s1228 + $0xc] sm:%s1220] %v1235
                %v1237 = vld [vmem:[%s1227 + $0x10] sm:%s1220]
                %1238 = vst [vmem:[%s1228 + $0x10] sm:%s1220] %v1237
                %v1239 = vld [vmem:[%s1227 + $0x14] sm:%s1220]
                %1240 = vst [vmem:[%s1228 + $0x14] sm:%s1220] %v1239
                %v1241 = vld [vmem:[%s1227 + $0x18] sm:%s1220]
                %1242 = vst [vmem:[%s1228 + $0x18] sm:%s1220] %v1241
                %v1243 = vld [vmem:[%s1227 + $0x1c] sm:%s1220]
                %1244 = vst [vmem:[%s1228 + $0x1c] sm:%s1220] %v1243
                %v1245 = vld [vmem:[%s1227 + $0x20] sm:%s1220]
                %1246 = vst [vmem:[%s1228 + $0x20] sm:%s1220] %v1245
                %v1247 = vld [vmem:[%s1227 + $0x24] sm:%s1220]
                %1248 = vst [vmem:[%s1228 + $0x24] sm:%s1220] %v1247
                %v1249 = vld [vmem:[%s1227 + $0x28] sm:%s1220]
                %1250 = vst [vmem:[%s1228 + $0x28] sm:%s1220] %v1249
                %v1251 = vld [vmem:[%s1227 + $0x2c] sm:%s1220]
                %1252 = vst [vmem:[%s1228 + $0x2c] sm:%s1220] %v1251
                %v1253 = vld [vmem:[%s1227 + $0x30] sm:%s1220]
                %1254 = vst [vmem:[%s1228 + $0x30] sm:%s1220] %v1253
                %v1255 = vld [vmem:[%s1227 + $0x34] sm:%s1220]
                %1256 = vst [vmem:[%s1228 + $0x34] sm:%s1220] %v1255
                %v1257 = vld [vmem:[%s1227 + $0x38] sm:%s1220]
                %1258 = vst [vmem:[%s1228 + $0x38] sm:%s1220] %v1257
                %v1259 = vld [vmem:[%s1227 + $0x3c] sm:%s1220]
                %1260 = vst [vmem:[%s1228 + $0x3c] sm:%s1220] %v1259
                %v1261 = vld [vmem:[%s1227 + $0x40] sm:%s1220]
                %1262 = vst [vmem:[%s1228 + $0x80] sm:%s1220] %v1261
                %v1263 = vld [vmem:[%s1227 + $0x44] sm:%s1220]
                %1264 = vst [vmem:[%s1228 + $0x84] sm:%s1220] %v1263
                %v1265 = vld [vmem:[%s1227 + $0x48] sm:%s1220]
                %1266 = vst [vmem:[%s1228 + $0x88] sm:%s1220] %v1265
                %v1267 = vld [vmem:[%s1227 + $0x4c] sm:%s1220]
                %1268 = vst [vmem:[%s1228 + $0x8c] sm:%s1220] %v1267
                %v1269 = vld [vmem:[%s1227 + $0x50] sm:%s1220]
                %1270 = vst [vmem:[%s1228 + $0x90] sm:%s1220] %v1269
                %v1271 = vld [vmem:[%s1227 + $0x54] sm:%s1220]
                %1272 = vst [vmem:[%s1228 + $0x94] sm:%s1220] %v1271
                %v1273 = vld [vmem:[%s1227 + $0x58] sm:%s1220]
                %1274 = vst [vmem:[%s1228 + $0x98] sm:%s1220] %v1273
                %v1275 = vld [vmem:[%s1227 + $0x5c] sm:%s1220]
                %1276 = vst [vmem:[%s1228 + $0x9c] sm:%s1220] %v1275
                %v1277 = vld [vmem:[%s1227 + $0x60] sm:%s1220]
                %1278 = vst [vmem:[%s1228 + $0xa0] sm:%s1220] %v1277
                %v1279 = vld [vmem:[%s1227 + $0x64] sm:%s1220]
                %1280 = vst [vmem:[%s1228 + $0xa4] sm:%s1220] %v1279
                %v1281 = vld [vmem:[%s1227 + $0x68] sm:%s1220]
                %1282 = vst [vmem:[%s1228 + $0xa8] sm:%s1220] %v1281
                %v1283 = vld [vmem:[%s1227 + $0x6c] sm:%s1220]
                %1284 = vst [vmem:[%s1228 + $0xac] sm:%s1220] %v1283
                %v1285 = vld [vmem:[%s1227 + $0x70] sm:%s1220]
                %1286 = vst [vmem:[%s1228 + $0xb0] sm:%s1220] %v1285
                %v1287 = vld [vmem:[%s1227 + $0x74] sm:%s1220]
                %1288 = vst [vmem:[%s1228 + $0xb4] sm:%s1220] %v1287
                %v1289 = vld [vmem:[%s1227 + $0x78] sm:%s1220]
                %1290 = vst [vmem:[%s1228 + $0xb8] sm:%s1220] %v1289
                %v1291 = vld [vmem:[%s1227 + $0x7c] sm:%s1220]
                %1292 = vst [vmem:[%s1228 + $0xbc] sm:%s1220] %v1291
              $region102: #{tpu_custom_call.1} parent=96 // loop_footer
                %s1226 = sadd.s32 1, %s1222
              $region103: #{tpu_custom_call.1} parent=96 // loop_footer_branch
                %1221 = sbr.rel target = $region99
              $region104: #{tpu_custom_call.1} parent=96 // loop_exit
                _
            $region97: #{tpu_custom_call.1} parent=88 // pred_fallthru
              _
          $region89: #{tpu_custom_call.1} parent=84 // pred_fallthru
            _
          %1377 = vnop
        $region85: #{tpu_custom_call.1} parent=39 // pred_fallthru
          _
        // Predicated region
        $region123: #{tpu_custom_call.1} parent=39 // pred_check
          %p1378 = pneg %p226
        $region124: #{tpu_custom_call.1} parent=39 // pred_check_branch
          %1380 = sbr.rel (%p1378) target = $region126
        $region125: #{tpu_custom_call.1} parent=39 // pred_region
          %s1381 = smul.u32 16, %s24
          %s1382 = smul.addr %s23, 64
          %s1383 = sadd.s32 %s1381, %s1382
          %s1384 = smul.addr %s1383, 4
          %s1385 = scalar_lea.vmem %s7, %s1384
          // Predicated region
          $region127: #{tpu_custom_call.1} parent=125 // pred_check
            _
          $region128: #{tpu_custom_call.1} parent=125 // pred_check_branch
            %1387 = sbr.rel (0) target = $region130
          $region129: #{tpu_custom_call.1} parent=125 // pred_region
            // Predicated region
            $region131: #{tpu_custom_call.1} parent=129 // pred_check
              _
            $region132: #{tpu_custom_call.1} parent=129 // pred_check_branch
              %1389 = sbr.rel target = $region134
            $region133: #{tpu_custom_call.1} parent=129 // pred_region
              // Predicated region
              $region146: #{tpu_custom_call.1} parent=133 // pred_check
                _
              $region147: #{tpu_custom_call.1} parent=133 // pred_check_branch
                %1467 = sbr.rel (0) target = $region149
              $region148: #{tpu_custom_call.1} parent=133 // pred_region
                loop: start=0, step=1, limit=1
                $region150: #{tpu_custom_call.1} parent=148 // loop_pre_header
                  _
                $region151: #{tpu_custom_call.1} parent=148 // loop_header
                  %s1469 = sphi 0, %s1473
                  %p1470 = scmp.ge.s32.totalorder %s1469, 1
                  %s1474 = sphi %s1031, %s1031
                  %s1475 = sphi %s1385, %s1385
                $region152: #{tpu_custom_call.1} parent=148 // loop_header_branch
                  %1472 = sbr.rel (%p1470) target = $region156
                $region153: #{tpu_custom_call.1} parent=148 // loop_body
                  _
                $region154: #{tpu_custom_call.1} parent=148 // loop_footer
                  %s1473 = sadd.s32 1, %s1469
                $region155: #{tpu_custom_call.1} parent=148 // loop_footer_branch
                  %1468 = sbr.rel target = $region151
                $region156: #{tpu_custom_call.1} parent=148 // loop_exit
                  _
                %s1477 = ssub.s32 16, 1
                loop: start=0, step=1, limit=1
                $region157: #{tpu_custom_call.1} parent=148 // loop_pre_header
                  _
                $region158: #{tpu_custom_call.1} parent=148 // loop_header
                  %s1479 = sphi 0, %s1483
                  %p1480 = scmp.ge.s32.totalorder %s1479, 1
                  %s1484 = sphi %s1031, %s1031
                  %s1485 = sphi %s1385, %s1385
                $region159: #{tpu_custom_call.1} parent=148 // loop_header_branch
                  %1482 = sbr.rel (%p1480) target = $region163
                $region160: #{tpu_custom_call.1} parent=148 // loop_body
                  %v1486 = vld [vmem:[%s1484] sm:%s1477]
                  %1487 = vst [vmem:[%s1485] sm:%s1477] %v1486
                  %v1488 = vld [vmem:[%s1484 + $0x4] sm:%s1477]
                  %1489 = vst [vmem:[%s1485 + $0x4] sm:%s1477] %v1488
                  %v1490 = vld [vmem:[%s1484 + $0x8] sm:%s1477]
                  %1491 = vst [vmem:[%s1485 + $0x8] sm:%s1477] %v1490
                  %v1492 = vld [vmem:[%s1484 + $0xc] sm:%s1477]
                  %1493 = vst [vmem:[%s1485 + $0xc] sm:%s1477] %v1492
                  %v1494 = vld [vmem:[%s1484 + $0x10] sm:%s1477]
                  %1495 = vst [vmem:[%s1485 + $0x10] sm:%s1477] %v1494
                  %v1496 = vld [vmem:[%s1484 + $0x14] sm:%s1477]
                  %1497 = vst [vmem:[%s1485 + $0x14] sm:%s1477] %v1496
                  %v1498 = vld [vmem:[%s1484 + $0x18] sm:%s1477]
                  %1499 = vst [vmem:[%s1485 + $0x18] sm:%s1477] %v1498
                  %v1500 = vld [vmem:[%s1484 + $0x1c] sm:%s1477]
                  %1501 = vst [vmem:[%s1485 + $0x1c] sm:%s1477] %v1500
                  %v1502 = vld [vmem:[%s1484 + $0x20] sm:%s1477]
                  %1503 = vst [vmem:[%s1485 + $0x20] sm:%s1477] %v1502
                  %v1504 = vld [vmem:[%s1484 + $0x24] sm:%s1477]
                  %1505 = vst [vmem:[%s1485 + $0x24] sm:%s1477] %v1504
                  %v1506 = vld [vmem:[%s1484 + $0x28] sm:%s1477]
                  %1507 = vst [vmem:[%s1485 + $0x28] sm:%s1477] %v1506
                  %v1508 = vld [vmem:[%s1484 + $0x2c] sm:%s1477]
                  %1509 = vst [vmem:[%s1485 + $0x2c] sm:%s1477] %v1508
                  %v1510 = vld [vmem:[%s1484 + $0x30] sm:%s1477]
                  %1511 = vst [vmem:[%s1485 + $0x30] sm:%s1477] %v1510
                  %v1512 = vld [vmem:[%s1484 + $0x34] sm:%s1477]
                  %1513 = vst [vmem:[%s1485 + $0x34] sm:%s1477] %v1512
                  %v1514 = vld [vmem:[%s1484 + $0x38] sm:%s1477]
                  %1515 = vst [vmem:[%s1485 + $0x38] sm:%s1477] %v1514
                  %v1516 = vld [vmem:[%s1484 + $0x3c] sm:%s1477]
                  %1517 = vst [vmem:[%s1485 + $0x3c] sm:%s1477] %v1516
                  %v1518 = vld [vmem:[%s1484 + $0x40] sm:%s1477]
                  %1519 = vst [vmem:[%s1485 + $0x80] sm:%s1477] %v1518
                  %v1520 = vld [vmem:[%s1484 + $0x44] sm:%s1477]
                  %1521 = vst [vmem:[%s1485 + $0x84] sm:%s1477] %v1520
                  %v1522 = vld [vmem:[%s1484 + $0x48] sm:%s1477]
                  %1523 = vst [vmem:[%s1485 + $0x88] sm:%s1477] %v1522
                  %v1524 = vld [vmem:[%s1484 + $0x4c] sm:%s1477]
                  %1525 = vst [vmem:[%s1485 + $0x8c] sm:%s1477] %v1524
                  %v1526 = vld [vmem:[%s1484 + $0x50] sm:%s1477]
                  %1527 = vst [vmem:[%s1485 + $0x90] sm:%s1477] %v1526
                  %v1528 = vld [vmem:[%s1484 + $0x54] sm:%s1477]
                  %1529 = vst [vmem:[%s1485 + $0x94] sm:%s1477] %v1528
                  %v1530 = vld [vmem:[%s1484 + $0x58] sm:%s1477]
                  %1531 = vst [vmem:[%s1485 + $0x98] sm:%s1477] %v1530
                  %v1532 = vld [vmem:[%s1484 + $0x5c] sm:%s1477]
                  %1533 = vst [vmem:[%s1485 + $0x9c] sm:%s1477] %v1532
                  %v1534 = vld [vmem:[%s1484 + $0x60] sm:%s1477]
                  %1535 = vst [vmem:[%s1485 + $0xa0] sm:%s1477] %v1534
                  %v1536 = vld [vmem:[%s1484 + $0x64] sm:%s1477]
                  %1537 = vst [vmem:[%s1485 + $0xa4] sm:%s1477] %v1536
                  %v1538 = vld [vmem:[%s1484 + $0x68] sm:%s1477]
                  %1539 = vst [vmem:[%s1485 + $0xa8] sm:%s1477] %v1538
                  %v1540 = vld [vmem:[%s1484 + $0x6c] sm:%s1477]
                  %1541 = vst [vmem:[%s1485 + $0xac] sm:%s1477] %v1540
                  %v1542 = vld [vmem:[%s1484 + $0x70] sm:%s1477]
                  %1543 = vst [vmem:[%s1485 + $0xb0] sm:%s1477] %v1542
                  %v1544 = vld [vmem:[%s1484 + $0x74] sm:%s1477]
                  %1545 = vst [vmem:[%s1485 + $0xb4] sm:%s1477] %v1544
                  %v1546 = vld [vmem:[%s1484 + $0x78] sm:%s1477]
                  %1547 = vst [vmem:[%s1485 + $0xb8] sm:%s1477] %v1546
                  %v1548 = vld [vmem:[%s1484 + $0x7c] sm:%s1477]
                  %1549 = vst [vmem:[%s1485 + $0xbc] sm:%s1477] %v1548
                $region161: #{tpu_custom_call.1} parent=148 // loop_footer
                  %s1483 = sadd.s32 1, %s1479
                $region162: #{tpu_custom_call.1} parent=148 // loop_footer_branch
                  %1478 = sbr.rel target = $region158
                $region163: #{tpu_custom_call.1} parent=148 // loop_exit
                  _
              $region149: #{tpu_custom_call.1} parent=133 // pred_fallthru
                _
            $region134: #{tpu_custom_call.1} parent=129 // pred_fallthru
              _
            // Predicated region
            $region135: #{tpu_custom_call.1} parent=129 // pred_check
              _
            $region136: #{tpu_custom_call.1} parent=129 // pred_check_branch
              %1391 = sbr.rel (0) target = $region138
            $region137: #{tpu_custom_call.1} parent=129 // pred_region
              %s1393 = ssub.s32 16, 1
              loop: start=0, step=1, limit=1
              $region139: #{tpu_custom_call.1} parent=137 // loop_pre_header
                _
              $region140: #{tpu_custom_call.1} parent=137 // loop_header
                %s1395 = sphi 0, %s1399
                %p1396 = scmp.ge.s32.totalorder %s1395, 1
                %s1400 = sphi %s1031, %s1031
                %s1401 = sphi %s1385, %s1385
              $region141: #{tpu_custom_call.1} parent=137 // loop_header_branch
                %1398 = sbr.rel (%p1396) target = $region145
              $region142: #{tpu_custom_call.1} parent=137 // loop_body
                %v1402 = vld [vmem:[%s1400] sm:%s1393]
                %1403 = vst [vmem:[%s1401] sm:%s1393] %v1402
                %v1404 = vld [vmem:[%s1400 + $0x4] sm:%s1393]
                %1405 = vst [vmem:[%s1401 + $0x4] sm:%s1393] %v1404
                %v1406 = vld [vmem:[%s1400 + $0x8] sm:%s1393]
                %1407 = vst [vmem:[%s1401 + $0x8] sm:%s1393] %v1406
                %v1408 = vld [vmem:[%s1400 + $0xc] sm:%s1393]
                %1409 = vst [vmem:[%s1401 + $0xc] sm:%s1393] %v1408
                %v1410 = vld [vmem:[%s1400 + $0x10] sm:%s1393]
                %1411 = vst [vmem:[%s1401 + $0x10] sm:%s1393] %v1410
                %v1412 = vld [vmem:[%s1400 + $0x14] sm:%s1393]
                %1413 = vst [vmem:[%s1401 + $0x14] sm:%s1393] %v1412
                %v1414 = vld [vmem:[%s1400 + $0x18] sm:%s1393]
                %1415 = vst [vmem:[%s1401 + $0x18] sm:%s1393] %v1414
                %v1416 = vld [vmem:[%s1400 + $0x1c] sm:%s1393]
                %1417 = vst [vmem:[%s1401 + $0x1c] sm:%s1393] %v1416
                %v1418 = vld [vmem:[%s1400 + $0x20] sm:%s1393]
                %1419 = vst [vmem:[%s1401 + $0x20] sm:%s1393] %v1418
                %v1420 = vld [vmem:[%s1400 + $0x24] sm:%s1393]
                %1421 = vst [vmem:[%s1401 + $0x24] sm:%s1393] %v1420
                %v1422 = vld [vmem:[%s1400 + $0x28] sm:%s1393]
                %1423 = vst [vmem:[%s1401 + $0x28] sm:%s1393] %v1422
                %v1424 = vld [vmem:[%s1400 + $0x2c] sm:%s1393]
                %1425 = vst [vmem:[%s1401 + $0x2c] sm:%s1393] %v1424
                %v1426 = vld [vmem:[%s1400 + $0x30] sm:%s1393]
                %1427 = vst [vmem:[%s1401 + $0x30] sm:%s1393] %v1426
                %v1428 = vld [vmem:[%s1400 + $0x34] sm:%s1393]
                %1429 = vst [vmem:[%s1401 + $0x34] sm:%s1393] %v1428
                %v1430 = vld [vmem:[%s1400 + $0x38] sm:%s1393]
                %1431 = vst [vmem:[%s1401 + $0x38] sm:%s1393] %v1430
                %v1432 = vld [vmem:[%s1400 + $0x3c] sm:%s1393]
                %1433 = vst [vmem:[%s1401 + $0x3c] sm:%s1393] %v1432
                %v1434 = vld [vmem:[%s1400 + $0x40] sm:%s1393]
                %1435 = vst [vmem:[%s1401 + $0x80] sm:%s1393] %v1434
                %v1436 = vld [vmem:[%s1400 + $0x44] sm:%s1393]
                %1437 = vst [vmem:[%s1401 + $0x84] sm:%s1393] %v1436
                %v1438 = vld [vmem:[%s1400 + $0x48] sm:%s1393]
                %1439 = vst [vmem:[%s1401 + $0x88] sm:%s1393] %v1438
                %v1440 = vld [vmem:[%s1400 + $0x4c] sm:%s1393]
                %1441 = vst [vmem:[%s1401 + $0x8c] sm:%s1393] %v1440
                %v1442 = vld [vmem:[%s1400 + $0x50] sm:%s1393]
                %1443 = vst [vmem:[%s1401 + $0x90] sm:%s1393] %v1442
                %v1444 = vld [vmem:[%s1400 + $0x54] sm:%s1393]
                %1445 = vst [vmem:[%s1401 + $0x94] sm:%s1393] %v1444
                %v1446 = vld [vmem:[%s1400 + $0x58] sm:%s1393]
                %1447 = vst [vmem:[%s1401 + $0x98] sm:%s1393] %v1446
                %v1448 = vld [vmem:[%s1400 + $0x5c] sm:%s1393]
                %1449 = vst [vmem:[%s1401 + $0x9c] sm:%s1393] %v1448
                %v1450 = vld [vmem:[%s1400 + $0x60] sm:%s1393]
                %1451 = vst [vmem:[%s1401 + $0xa0] sm:%s1393] %v1450
                %v1452 = vld [vmem:[%s1400 + $0x64] sm:%s1393]
                %1453 = vst [vmem:[%s1401 + $0xa4] sm:%s1393] %v1452
                %v1454 = vld [vmem:[%s1400 + $0x68] sm:%s1393]
                %1455 = vst [vmem:[%s1401 + $0xa8] sm:%s1393] %v1454
                %v1456 = vld [vmem:[%s1400 + $0x6c] sm:%s1393]
                %1457 = vst [vmem:[%s1401 + $0xac] sm:%s1393] %v1456
                %v1458 = vld [vmem:[%s1400 + $0x70] sm:%s1393]
                %1459 = vst [vmem:[%s1401 + $0xb0] sm:%s1393] %v1458
                %v1460 = vld [vmem:[%s1400 + $0x74] sm:%s1393]
                %1461 = vst [vmem:[%s1401 + $0xb4] sm:%s1393] %v1460
                %v1462 = vld [vmem:[%s1400 + $0x78] sm:%s1393]
                %1463 = vst [vmem:[%s1401 + $0xb8] sm:%s1393] %v1462
                %v1464 = vld [vmem:[%s1400 + $0x7c] sm:%s1393]
                %1465 = vst [vmem:[%s1401 + $0xbc] sm:%s1393] %v1464
              $region143: #{tpu_custom_call.1} parent=137 // loop_footer
                %s1399 = sadd.s32 1, %s1395
              $region144: #{tpu_custom_call.1} parent=137 // loop_footer_branch
                %1394 = sbr.rel target = $region140
              $region145: #{tpu_custom_call.1} parent=137 // loop_exit
                _
            $region138: #{tpu_custom_call.1} parent=129 // pred_fallthru
              _
          $region130: #{tpu_custom_call.1} parent=125 // pred_fallthru
            _
          %1550 = vnop
        $region126: #{tpu_custom_call.1} parent=39 // pred_fallthru
          _
      $region40: #{tpu_custom_call.1} parent=5 // pred_fallthru
        _
      %p1551 = scmp.le.s32.totalorder 2, %s14
      // Predicated region
      $region164: #{tpu_custom_call.1} parent=5 // pred_check
        %p1552 = pneg %p1551
      $region165: #{tpu_custom_call.1} parent=5 // pred_check_branch
        %1554 = sbr.rel (%p1552) target = $region167
      $region166: #{tpu_custom_call.1} parent=5 // pred_region
        %s1555 = ssub.s32 %s14, 2
        // Predicated region
        $region168: #{tpu_custom_call.1} parent=166 // pred_check
          %p1556 = pneg %p176
        $region169: #{tpu_custom_call.1} parent=166 // pred_check_branch
          %1558 = sbr.rel (%p1556) target = $region171
        $region170: #{tpu_custom_call.1} parent=166 // pred_region
          %s1559 = sand.u32 %s161, 1
          %s1560 = sand.u32 %s161, 1
          %s1561 = smul.addr %s1560, 128
          %s1562 = scalar_lea.vmem [#allocation2], %s1561
        $region171: #{tpu_custom_call.1} parent=166 // pred_fallthru
          _
        // Predicated region
        $region172: #{tpu_custom_call.1} parent=166 // pred_check
          %p1563 = pneg %p204
        $region173: #{tpu_custom_call.1} parent=166 // pred_check_branch
          %1565 = sbr.rel (%p1563) target = $region175
        $region174: #{tpu_custom_call.1} parent=166 // pred_region
          %s1566 = sand.u32 %s189, 1
          %s1567 = sand.u32 %s189, 1
          %s1568 = smul.addr %s1567, 128
          %s1569 = scalar_lea.vmem [#allocation3], %s1568
        $region175: #{tpu_custom_call.1} parent=166 // pred_fallthru
          _
        // Predicated region
        $region176: #{tpu_custom_call.1} parent=166 // pred_check
          %p1570 = pneg %p232
        $region177: #{tpu_custom_call.1} parent=166 // pred_check_branch
          %1572 = sbr.rel (%p1570) target = $region179
        $region178: #{tpu_custom_call.1} parent=166 // pred_region
          %s1573 = sand.u32 %s217, 1
          %s1574 = sand.u32 %s217, 1
          %s1575 = smul.addr %s1574, 128
          %s1576 = scalar_lea.vmem [#allocation4], %s1575
        $region179: #{tpu_custom_call.1} parent=166 // pred_fallthru
          _
      $region167: #{tpu_custom_call.1} parent=5 // pred_fallthru
        _
    $region6: #{tpu_custom_call.1} parent=1 // loop_footer
      %s18 = sadd.s32 1, %s14
    $region7: #{tpu_custom_call.1} parent=1 // loop_footer_branch
      %13 = sbr.rel target = $region3
    $region8: #{tpu_custom_call.1} parent=1 // loop_exit
      _

</llo_original>
